<compile_context>
chip_gen: v6e
topology: v6e:2x2x1
jax: 0.10.0
libtpu: 0.0.40
codegen_flags: <defaults>
</compile_context>

<pallas_src>
import jax
import jax.numpy as jnp
from jax.experimental import pallas as pl
from jax.experimental.pallas import tpu as pltpu


def _round_up(x, m):
    return (x + m - 1) // m * m


def _conv_matmul_relu_kernel(p_ref, w_ref, b_ref, o_ref):
    # p_ref: (tm, K) bf16 patches; w_ref: (K, tn) bf16; b_ref: (1, tn) f32.
    acc = jnp.dot(p_ref[...], w_ref[...], preferred_element_type=jnp.float32)
    acc = acc + b_ref[...]
    # ReLU fused here (elementwise; commutes with the PixelShuffle permutation).
    o_ref[...] = jnp.maximum(acc, 0.0).astype(o_ref.dtype)


def _build_call(M, K, cout_pad, tm, tn, single_buffer_w, lhs_dtype):
    grid = (pl.cdiv(M, tm), pl.cdiv(cout_pad, tn))

    if single_buffer_w:
        # Weight / bias blocks never change across the grid -> one VMEM buffer.
        w_spec = pl.BlockSpec((K, tn), lambda i, j: (0, j),
                              pipeline_mode=pl.Buffered(1))
        b_spec = pl.BlockSpec((1, tn), lambda i, j: (0, j),
                              pipeline_mode=pl.Buffered(1))
        w_bufs = 1
    else:
        w_spec = pl.BlockSpec((K, tn), lambda i, j: (0, j))
        b_spec = pl.BlockSpec((1, tn), lambda i, j: (0, j))
        w_bufs = 2

    itemsize = jnp.dtype(lhs_dtype).itemsize
    need = (2 * tm * K * itemsize          # double-buffered patch tiles
            + w_bufs * K * tn * itemsize   # weight tile(s)
            + w_bufs * tn * 4              # bias tile(s)
            + 2 * tm * tn * 4)             # double-buffered f32 output tiles
    # Explicit VMEM budget (v7x: 64 MiB physical / 32 MiB default scoped).
    vmem_limit = int(min(max(2 * need + (4 << 20), 32 << 20), 48 << 20))

    return pl.pallas_call(
        _conv_matmul_relu_kernel,
        out_shape=jax.ShapeDtypeStruct((M, cout_pad), jnp.float32),
        grid_spec=pltpu.PrefetchScalarGridSpec(
            num_scalar_prefetch=0,
            grid=grid,
            in_specs=[
                pl.BlockSpec((tm, K), lambda i, j: (i, 0)),
                w_spec,
                b_spec,
            ],
            out_specs=pl.BlockSpec((tm, tn), lambda i, j: (i, j)),
        ),
        compiler_params=pltpu.CompilerParams(
            dimension_semantics=("parallel", "parallel"),
            vmem_limit_bytes=vmem_limit,
        ),
    )


def conv4x4_s2_p1_bias_relu(patches, w_mat, bias_row, *, tm=256, tn=256):
    """patches: (M, K) bf16; w_mat: (K, Cout_pad) bf16; bias_row: (1, Cout_pad) f32."""
    M, K = patches.shape
    cout_pad = w_mat.shape[1]
    tm_eff = min(tm, _round_up(M, 8))
    tn_eff = min(tn, cout_pad)
    n_cout_tiles = pl.cdiv(cout_pad, tn_eff)

    try:
        call = _build_call(M, K, cout_pad, tm_eff, tn_eff,
                           single_buffer_w=(n_cout_tiles == 1),
                           lhs_dtype=patches.dtype)
        return call(patches, w_mat, bias_row)
    except Exception:
        # Fallback if this JAX build rejects pipeline_mode=pl.Buffered(1);
        # genuine errors re-surface from the plain-spec call below.
        call = _build_call(M, K, cout_pad, tm_eff, tn_eff,
                           single_buffer_w=False, lhs_dtype=patches.dtype)
        return call(patches, w_mat, bias_row)


def upsampler_forward(x_nchw, weight, bias, *, tm=256, tn=256, nhwc_output=False):
    """x_nchw: (N, C_in, H, W) f32; weight: (C_out, C_in, 4, 4); bias: (C_out,)."""
    Cout, Cin, KH, KW = weight.shape
    r = 5
    n_feats = Cout // (r * r)
    N, _, H, W = x_nchw.shape
    H_out, W_out = H // 2, W // 2       # k=4, s=2, p=1

    # ---- im2col (glue); cast to bf16 early to halve the patch-tensor HBM bytes ----
    # TODO(synk): for v5e, replace the HBM-materialized patch tensor with an
    # in-kernel 16-tap accumulation (pl.ANY input + per-M-tile DMA of an input
    # band) to drop one full memory pass over the 4x-expanded patches.
    x_nhwc = jnp.transpose(x_nchw, (0, 2, 3, 1)).astype(jnp.bfloat16)
    x_pad = jnp.pad(x_nhwc, ((0, 0), (1, 1), (1, 1), (0, 0)))
    taps = []
    for kh in range(KH):
        for kw in range(KW):
            taps.append(x_pad[:, kh:kh + 2 * H_out:2, kw:kw + 2 * W_out:2, :])
    patches = jnp.stack(taps, axis=3)                     # (N, Ho, Wo, KH*KW, Cin)
    patches = patches.reshape(N * H_out * W_out, KH * KW * Cin)

    # weight (Cout, Cin, kh, kw) -> (kh, kw, Cin, Cout) -> (K, Cout), matching
    # the patch K order.  Pad Cout to a multiple of 128 for lane-dense stores.
    K = KH * KW * Cin
    cout_pad = _round_up(Cout, 128)
    w_mat = jnp.transpose(weight, (2, 3, 1, 0)).reshape(K, Cout).astype(jnp.bfloat16)
    w_mat = jnp.pad(w_mat, ((0, 0), (0, cout_pad - Cout)))
    b_row = jnp.pad(bias.astype(jnp.float32), (0, cout_pad - Cout)).reshape(1, cout_pad)

    # ---- hot path: Pallas matmul + bias + ReLU (f32 accumulate, f32 out) ----
    y = conv4x4_s2_p1_bias_relu(patches, w_mat, b_row, tm=tm, tn=tn)
    y = y[:, :Cout].reshape(N, H_out, W_out, n_feats, r, r)

    # ---- PixelShuffle(5): pure permutation (glue); ReLU already applied ----
    if nhwc_output:
        # Cheaper if downstream consumes NHWC (skips the channel-major move).
        return jnp.transpose(y, (0, 1, 4, 2, 5, 3)).reshape(
            N, H_out * r, W_out * r, n_feats)
    y = jnp.transpose(y, (0, 3, 1, 4, 2, 5))              # (N, nf, Ho, r, Wo, r)
    return y.reshape(N, n_feats, H_out * r, W_out * r)


def _reference_forward(x_nchw, weight, bias):
    """Plain-JAX f32 reference matching PyTorch semantics."""
    Cout = weight.shape[0]
    r = 5
    n_feats = Cout // (r * r)
    N, _, H, W = x_nchw.shape
    H_out, W_out = H // 2, W // 2
    y = jax.lax.conv_general_dilated(
        x_nchw, weight, window_strides=(2, 2), padding=((1, 1), (1, 1)),
        dimension_numbers=("NCHW", "OIHW", "NCHW"))
    y = y + bias[None, :, None, None]
    y = y.reshape(N, n_feats, r, r, H_out, W_out)
    y = jnp.transpose(y, (0, 1, 4, 2, 5, 3)).reshape(N, n_feats, r * H_out, r * W_out)
    return jnp.maximum(y, 0.0)


if __name__ == "__main__":
    n_feats = 8          # small stand-in for the module's n_feats=64
    N, H, W = 2, 32, 32
    Cout = 25 * n_feats  # 200

    key = jax.random.PRNGKey(0)
    kx, kw, kb = jax.random.split(key, 3)
    x = jax.random.normal(kx, (N, n_feats, H, W), dtype=jnp.float32)
    weight = 0.05 * jax.random.normal(kw, (Cout, n_feats, 4, 4), dtype=jnp.float32)
    bias = 0.05 * jax.random.normal(kb, (Cout,), dtype=jnp.float32)

    out = upsampler_forward(x, weight, bias)
    out = jax.block_until_ready(out)

    ref = _reference_forward(x, weight, bias)
    assert out.shape == (N, n_feats, 5 * H // 2, 5 * W // 2), out.shape
    # bf16 LHS/RHS with f32 accumulation -> loosened tolerance vs f32 reference.
    err = float(jnp.max(jnp.abs(out - ref)))
    assert jnp.allclose(out, ref, atol=3e-2, rtol=3e-2), err

    print("KERNEL_OK")
</pallas_src>

<mosaic_0001>
module attributes {stable_mosaic.version = 11 : i64} {
  func.func @_conv_matmul_relu_kernel(%arg0: i32, %arg1: i32, %arg2: memref<256x128xbf16, #tpu.memory_space<vmem>>, %arg3: memref<128x256xbf16, #tpu.memory_space<vmem>>, %arg4: memref<1x256xf32, #tpu.memory_space<vmem>>, %arg5: memref<256x256xf32, #tpu.memory_space<vmem>>) attributes {dimension_semantics = [#tpu.dimension_semantics<parallel>, #tpu.dimension_semantics<parallel>], iteration_bounds = array<i64: 2, 1>, scalar_prefetch = 0 : i64, scratch_operands = 0 : i64, tpu.core_type = #tpu.core_type<tc>, window_params = [{transform_indices = @transform_0, window_bounds = array<i64: 256, 128>}, {pipeline_mode = #tpu.pipeline_mode<synchronous>, transform_indices = @transform_1, window_bounds = array<i64: 128, 256>}, {pipeline_mode = #tpu.pipeline_mode<synchronous>, transform_indices = @transform_2, window_bounds = array<i64: 1, 256>}, {transform_indices = @transform_3, window_bounds = array<i64: 256, 256>}]} {
    %c0 = arith.constant 0 : index
    %c0_0 = arith.constant 0 : index
    %0 = vector.load %arg2[%c0, %c0_0] : memref<256x128xbf16, #tpu.memory_space<vmem>>, vector<256x128xbf16>
    %c0_1 = arith.constant 0 : index
    %c0_2 = arith.constant 0 : index
    %1 = vector.load %arg3[%c0_1, %c0_2] : memref<128x256xbf16, #tpu.memory_space<vmem>>, vector<128x256xbf16>
    %cst = arith.constant dense<0.000000e+00> : vector<256x256xf32>
    %2 = tpu.matmul %0, %1, %cst {dimension_numbers = #tpu.dot_dimension_numbers<[1], [0], [0], [1], [0, 0, 1, 1], [], []>} : vector<256x128xbf16>, vector<128x256xbf16>, vector<256x256xf32> -> vector<256x256xf32>
    %c0_3 = arith.constant 0 : index
    %c0_4 = arith.constant 0 : index
    %3 = vector.load %arg4[%c0_3, %c0_4] : memref<1x256xf32, #tpu.memory_space<vmem>>, vector<1x256xf32>
    %4 = vector.broadcast %3 : vector<1x256xf32> to vector<256x256xf32>
    %5 = arith.addf %2, %4 : vector<256x256xf32>
    %cst_5 = arith.constant 0.000000e+00 : f32
    %6 = vector.broadcast %cst_5 : f32 to vector<256x256xf32>
    %7 = arith.maximumf %5, %6 : vector<256x256xf32>
    %c0_6 = arith.constant 0 : index
    %c0_7 = arith.constant 0 : index
    %8 = vector.load %arg5[%c0_6, %c0_7] : memref<256x256xf32, #tpu.memory_space<vmem>>, vector<256x256xf32>
    tpu.vector_store %arg5[%c0_6, %c0_7], %7 {strides = array<i32>} : memref<256x256xf32, #tpu.memory_space<vmem>>, vector<256x256xf32>,
    return
  }
  func.func @transform_0(%arg0: i32, %arg1: i32) -> (i32, i32) {
    %c0_i32 = arith.constant 0 : i32
    %c0_i32_0 = arith.constant 0 : i32
    return %arg0, %c0_i32 : i32, i32
  }
  func.func @transform_1(%arg0: i32, %arg1: i32) -> (i32, i32) {
    %c0_i32 = arith.constant 0 : i32
    %c0_i32_0 = arith.constant 0 : i32
    return %c0_i32, %arg1 : i32, i32
  }
  func.func @transform_2(%arg0: i32, %arg1: i32) -> (i32, i32) {
    %c0_i32 = arith.constant 0 : i32
    %c0_i32_0 = arith.constant 0 : i32
    return %c0_i32, %arg1 : i32, i32
  }
  func.func @transform_3(%arg0: i32, %arg1: i32) -> (i32, i32) {
    %c0_i32 = arith.constant 0 : i32
    return %arg0, %arg1 : i32, i32
  }
}

module attributes {stable_mosaic.version = 11 : i64} {
  func.func @_conv_matmul_relu_kernel(%arg0: i32, %arg1: i32, %arg2: memref<256x128xbf16, #tpu.memory_space<vmem>>, %arg3: memref<128x256xbf16, #tpu.memory_space<vmem>>, %arg4: memref<1x256xf32, #tpu.memory_space<vmem>>, %arg5: memref<256x256xf32, #tpu.memory_space<vmem>>) attributes {dimension_semantics = [#tpu.dimension_semantics<parallel>, #tpu.dimension_semantics<parallel>], iteration_bounds = array<i64: 2, 1>, scalar_prefetch = 0 : i64, scratch_operands = 0 : i64, tpu.core_type = #tpu.core_type<tc>, window_params = [{transform_indices = @transform_0, window_bounds = array<i64: 256, 128>}, {transform_indices = @transform_1, window_bounds = array<i64: 128, 256>}, {transform_indices = @transform_2, window_bounds = array<i64: 1, 256>}, {transform_indices = @transform_3, window_bounds = array<i64: 256, 256>}]} {
    %c0 = arith.constant 0 : index
    %c0_0 = arith.constant 0 : index
    %0 = vector.load %arg2[%c0, %c0_0] : memref<256x128xbf16, #tpu.memory_space<vmem>>, vector<256x128xbf16>
    %c0_1 = arith.constant 0 : index
    %c0_2 = arith.constant 0 : index
    %1 = vector.load %arg3[%c0_1, %c0_2] : memref<128x256xbf16, #tpu.memory_space<vmem>>, vector<128x256xbf16>
    %cst = arith.constant dense<0.000000e+00> : vector<256x256xf32>
    %2 = tpu.matmul %0, %1, %cst {dimension_numbers = #tpu.dot_dimension_numbers<[1], [0], [0], [1], [0, 0, 1, 1], [], []>} : vector<256x128xbf16>, vector<128x256xbf16>, vector<256x256xf32> -> vector<256x256xf32>
    %c0_3 = arith.constant 0 : index
    %c0_4 = arith.constant 0 : index
    %3 = vector.load %arg4[%c0_3, %c0_4] : memref<1x256xf32, #tpu.memory_space<vmem>>, vector<1x256xf32>
    %4 = vector.broadcast %3 : vector<1x256xf32> to vector<256x256xf32>
    %5 = arith.addf %2, %4 : vector<256x256xf32>
    %cst_5 = arith.constant 0.000000e+00 : f32
    %6 = vector.broadcast %cst_5 : f32 to vector<256x256xf32>
    %7 = arith.maximumf %5, %6 : vector<256x256xf32>
    %c0_6 = arith.constant 0 : index
    %c0_7 = arith.constant 0 : index
    %8 = vector.load %arg5[%c0_6, %c0_7] : memref<256x256xf32, #tpu.memory_space<vmem>>, vector<256x256xf32>
    tpu.vector_store %arg5[%c0_6, %c0_7], %7 {strides = array<i32>} : memref<256x256xf32, #tpu.memory_space<vmem>>, vector<256x256xf32>,
    return
  }
  func.func @transform_0(%arg0: i32, %arg1: i32) -> (i32, i32) {
    %c0_i32 = arith.constant 0 : i32
    %c0_i32_0 = arith.constant 0 : i32
    return %arg0, %c0_i32 : i32, i32
  }
  func.func @transform_1(%arg0: i32, %arg1: i32) -> (i32, i32) {
    %c0_i32 = arith.constant 0 : i32
    %c0_i32_0 = arith.constant 0 : i32
    return %c0_i32, %arg1 : i32, i32
  }
  func.func @transform_2(%arg0: i32, %arg1: i32) -> (i32, i32) {
    %c0_i32 = arith.constant 0 : i32
    %c0_i32_0 = arith.constant 0 : i32
    return %c0_i32, %arg1 : i32, i32
  }
  func.func @transform_3(%arg0: i32, %arg1: i32) -> (i32, i32) {
    %c0_i32 = arith.constant 0 : i32
    return %arg0, %arg1 : i32, i32
  }
}

</mosaic_0001>

<llo_original>
// kernel: tpu_custom_call.1
$region0: #{tpu_custom_call.1}
  #allocation0 [shape = 'u32[]', space=smem, size = 0x4, offset = 0x4, fixed_abs, tag = 'smem constant byte address 0x4 - core index']
  #allocation1 [shape = 'u32[144,128]{1,0:T(1,128)}', space=vmem, size = 0x12000, scoped, tag = 'internal scratch']
  %s0 = inlined_call_operand.hbm [shape: bf16[512,128], index: 0, kind: input, shape index: {}]
  %s1 = inlined_call_operand.hbm [shape: bf16[128,256], index: 1, kind: input, shape index: {}]
  %s2 = inlined_call_operand.vmem [shape: f32[1,256], index: 2, kind: input, shape index: {}]
  %s3 = inlined_call_operand.hbm [shape: f32[512,256], index: 3, kind: output, shape index: {}]
  %s4 = sld [smem:[#allocation0]]
  $region53: #{tpu_custom_call.1} parent=0
    _
  %s6 = ssub.s32 1, %s4
  %s7 = scalar_select 0, %s6, %s4
  $region1: #{tpu_custom_call.1} parent=0
    #allocation2 [shape = 'u8[131072]{0}', space=vmem, size = 0x20000, scoped, tag = 'input window, operand 0']
    #allocation3 [shape = 's32[2]{0}', space=sflag, size = 0x8, scoped, tag = 'scoped memory for tpu_custom_call.1']
    #allocation4 [shape = 's32[2]{0}', space=sflag, size = 0x8, scoped, tag = 'scoped memory for tpu_custom_call.1']
    #allocation5 [shape = 'u8[65536]{0}', space=vmem, size = 0x10000, scoped, tag = 'input window, operand 1, single buffered']
    #allocation6 [shape = 's32[1]{0}', space=sflag, size = 0x4, scoped, tag = 'scoped memory for tpu_custom_call.1']
    #allocation7 [shape = 'u8[524288]{0}', space=vmem, size = 0x80000, scoped, tag = 'output window, operand 0']
    %8 = vsyncpa [#allocation3], 0
    %s9 = scalar_lea.sflag [#allocation3], 1
    %10 = vsyncpa %s9, 0
    %11 = vsyncpa [#allocation6], 0
    %12 = vsyncpa [#allocation4], 0
    %s13 = scalar_lea.sflag [#allocation4], 1
    %14 = vsyncpa %s13, 0
    loop: start=0, step=1, limit=4
    $region2: #{tpu_custom_call.1} parent=1 // loop_pre_header
      _
    $region3: #{tpu_custom_call.1} parent=1 // loop_header
      %s16 = sphi 0, %s20
      %p17 = scmp.ge.s32.totalorder %s16, 4
      %s23 = sphi 0, %s35
      %s24 = sphi 0, %s31
      %s25 = sphi 0, %s23
      %s26 = sphi 0, %s24
      %s27 = sphi 0, %s25
      %s28 = sphi 0, %s26
      %s38 = sphi 0, %s40
      %s41 = sphi 0, %s38
      %s42 = sphi 0, %s41
      %s58 = sphi 0, %s42
      %s64 = sphi 0, %s66
      %s67 = sphi 0, %s64
      %s68 = sphi 0, %s67
      %s84 = sphi 0, %s68
      %s90 = sphi 0, %s92
      %s93 = sphi 0, %s90
      %s94 = sphi 0, %s93
      %s110 = sphi 0, %s94
      %s118 = sphi 0, %s120
      %s121 = sphi 0, %s118
      %s122 = sphi 0, %s121
      %s138 = sphi 0, %s122
    $region4: #{tpu_custom_call.1} parent=1 // loop_header_branch
      %19 = sbr.rel (%p17) target = $region8
    $region5: #{tpu_custom_call.1} parent=1 // loop_body
      %s21 = ssub.s32 %s16, 1
      %s22 = ssub.s32 %s16, 2
      %s29 = sadd.s32 1, %s24
      %p30 = scmp.ge.s32.totalorder %s29, 1
      %s31 = scalar_select %p30, 0, %s29
      %s32 = sadd.s32 1, %s23
      %s33 = scalar_select %p30, %s32, %s23
      %p34 = scmp.ge.s32.totalorder %s33, 2
      %s35 = scalar_select %p34, 0, %s33
      %s36 = ssub.s32 %s23, %s35
      %p37 = scmp.eq.s32.totalorder %s36, 0
      %s39 = sadd.s32 %s38, 1
      %s40 = scalar_select %p37, %s38, %s39
      %p43 = pneg %p37
      %p44 = scmp.eq.s32.totalorder %s16, 1
      %p45 = por %p43, %p44
      %p46 = scmp.ne.s32.totalorder %s38, %s41
      %p47 = scmp.eq.s32.totalorder %s16, 0
      %p48 = por %p46, %p47
      %p49 = scmp.ne.s32.totalorder %s38, %s41
      %p50 = scmp.eq.s32.totalorder %s21, 1
      %p51 = por %p49, %p50
      %p52 = scmp.ne.s32.totalorder %s41, %s42
      %p53 = scmp.eq.s32.totalorder %s21, 0
      %p54 = por %p52, %p53
      %p55 = scmp.ne.s32.totalorder %s41, %s42
      %p56 = scmp.eq.s32.totalorder %s22, 1
      %p57 = por %p55, %p56
      %p59 = scmp.ne.s32.totalorder %s42, %s58
      %p60 = scmp.eq.s32.totalorder %s22, 0
      %p61 = por %p59, %p60
      %s62 = ssub.s32 %s24, %s31
      %p63 = scmp.eq.s32.totalorder %s62, 0
      %s65 = sadd.s32 %s64, 1
      %s66 = scalar_select %p63, %s64, %s65
      %p69 = pneg %p63
      %p70 = scmp.eq.s32.totalorder %s16, 1
      %p71 = por %p69, %p70
      %p72 = scmp.ne.s32.totalorder %s64, %s67
      %p73 = scmp.eq.s32.totalorder %s16, 0
      %p74 = por %p72, %p73
      %p75 = scmp.ne.s32.totalorder %s64, %s67
      %p76 = scmp.eq.s32.totalorder %s21, 1
      %p77 = por %p75, %p76
      %p78 = scmp.ne.s32.totalorder %s67, %s68
      %p79 = scmp.eq.s32.totalorder %s21, 0
      %p80 = por %p78, %p79
      %p81 = scmp.ne.s32.totalorder %s67, %s68
      %p82 = scmp.eq.s32.totalorder %s22, 1
      %p83 = por %p81, %p82
      %p85 = scmp.ne.s32.totalorder %s68, %s84
      %p86 = scmp.eq.s32.totalorder %s22, 0
      %p87 = por %p85, %p86
      %s88 = ssub.s32 %s24, %s31
      %p89 = scmp.eq.s32.totalorder %s88, 0
      %s91 = sadd.s32 %s90, 1
      %s92 = scalar_select %p89, %s90, %s91
      %p95 = pneg %p89
      %p96 = scmp.eq.s32.totalorder %s16, 1
      %p97 = por %p95, %p96
      %p98 = scmp.ne.s32.totalorder %s90, %s93
      %p99 = scmp.eq.s32.totalorder %s16, 0
      %p100 = por %p98, %p99
      %p101 = scmp.ne.s32.totalorder %s90, %s93
      %p102 = scmp.eq.s32.totalorder %s21, 1
      %p103 = por %p101, %p102
      %p104 = scmp.ne.s32.totalorder %s93, %s94
      %p105 = scmp.eq.s32.totalorder %s21, 0
      %p106 = por %p104, %p105
      %p107 = scmp.ne.s32.totalorder %s93, %s94
      %p108 = scmp.eq.s32.totalorder %s22, 1
      %p109 = por %p107, %p108
      %p111 = scmp.ne.s32.totalorder %s94, %s110
      %p112 = scmp.eq.s32.totalorder %s22, 0
      %p113 = por %p111, %p112
      %s114 = ssub.s32 %s23, %s35
      %s115 = ssub.s32 %s24, %s31
      %s116 = sor.u32 %s114, %s115
      %p117 = scmp.eq.s32.totalorder %s116, 0
      %s119 = sadd.s32 %s118, 1
      %s120 = scalar_select %p117, %s118, %s119
      %p123 = pneg %p117
      %p124 = scmp.eq.s32.totalorder %s16, 1
      %p125 = por %p123, %p124
      %p126 = scmp.ne.s32.totalorder %s118, %s121
      %p127 = scmp.eq.s32.totalorder %s16, 0
      %p128 = por %p126, %p127
      %p129 = scmp.ne.s32.totalorder %s118, %s121
      %p130 = scmp.eq.s32.totalorder %s21, 1
      %p131 = por %p129, %p130
      %p132 = scmp.ne.s32.totalorder %s121, %s122
      %p133 = scmp.eq.s32.totalorder %s21, 0
      %p134 = por %p132, %p133
      %p135 = scmp.ne.s32.totalorder %s121, %s122
      %p136 = scmp.eq.s32.totalorder %s22, 1
      %p137 = por %p135, %p136
      %p139 = scmp.ne.s32.totalorder %s122, %s138
      %p140 = scmp.eq.s32.totalorder %s22, 0
      %p141 = por %p139, %p140
      %p142 = scmp.le.s32.totalorder 1, %s16
      %p143 = scmp.lt.s32.totalorder %s16, 3
      %p144 = pnand %p142, %p143
      %p145 = pneg %p144
      // Predicated region
      $region9: #{tpu_custom_call.1} parent=5 // pred_check
        _
      $region10: #{tpu_custom_call.1} parent=5 // pred_check_branch
        %147 = sbr.rel (%p144) target = $region12
      $region11: #{tpu_custom_call.1} parent=5 // pred_region
        %s148 = ssub.s32 %s16, 1
        // Predicated region
        $region13: #{tpu_custom_call.1} parent=11 // pred_check
          %p149 = pneg %p80
        $region14: #{tpu_custom_call.1} parent=11 // pred_check_branch
          %151 = sbr.rel (%p149) target = $region16
        $region15: #{tpu_custom_call.1} parent=11 // pred_region
          %s152 = smul.u32 2, %s26
          %s154 = ssub.s32 2048, 2048
          %155 = vsyncadd [#allocation6], %s154
          %s156 = smul.addr %s152, 64
          %s157 = scalar_lea.hbm %s1, %s156
          %s158 = sshll.u32 [#allocation5], 4
          %s159 = int_to_ptr.vmem [resolvable:$true] %s158
          %164 = dma.hbm_to_vmem [thread:$0]  %s157, 2048, %s159, [#allocation6], 128, 128, 8
        $region16: #{tpu_custom_call.1} parent=11 // pred_fallthru
          _
        // Predicated region
        $region17: #{tpu_custom_call.1} parent=11 // pred_check
          %p165 = pneg %p106
        $region18: #{tpu_custom_call.1} parent=11 // pred_check_branch
          %167 = sbr.rel (%p165) target = $region20
        $region19: #{tpu_custom_call.1} parent=11 // pred_region
          %s168 = smul.u32 2, %s26
          %p169 = scmp.lt.s32.totalorder %s168, 1
          %s170 = scalar_select %p169, %s168, 1
          %s171 = scalar_lea.vmem %s2, %s170
          %s172 = smul.u32 2, %s26
        $region20: #{tpu_custom_call.1} parent=11 // pred_fallthru
          _
      $region12: #{tpu_custom_call.1} parent=5 // pred_fallthru
        _
      %p173 = scmp.lt.s32.totalorder %s16, 2
      // Predicated region
      $region21: #{tpu_custom_call.1} parent=5 // pred_check
        %p174 = pneg %p173
      $region22: #{tpu_custom_call.1} parent=5 // pred_check_branch
        %176 = sbr.rel (%p174) target = $region24
      $region23: #{tpu_custom_call.1} parent=5 // pred_region
        // Predicated region
        $region25: #{tpu_custom_call.1} parent=23 // pred_check
          %p177 = pneg %p48
        $region26: #{tpu_custom_call.1} parent=23 // pred_check_branch
          %179 = sbr.rel (%p177) target = $region28
        $region27: #{tpu_custom_call.1} parent=23 // pred_region
          %s180 = sand.u32 %s38, 1
          %s181 = scalar_lea.sflag [#allocation3], %s180
          %s182 = sand.u32 %s38, 1
          %s183 = smul.addr %s182, 128
          %s184 = scalar_lea.vmem [#allocation2], %s183
          %s185 = smul.u32 32, %s23
          %s187 = ssub.s32 2048, 2048
          %188 = vsyncadd %s181, %s187
          %s189 = smul.addr %s185, 64
          %s190 = scalar_lea.hbm %s0, %s189
          %s191 = sshll.u32 %s184, 4
          %s192 = int_to_ptr.vmem [resolvable:$true] %s191
          %197 = dma.hbm_to_vmem [thread:$0]  %s190, 2048, %s192, %s181, 64, 64, 4
        $region28: #{tpu_custom_call.1} parent=23 // pred_fallthru
          _
      $region24: #{tpu_custom_call.1} parent=5 // pred_fallthru
        _
      %p198 = scmp.le.s32.totalorder 1, %s16
      %p199 = scmp.lt.s32.totalorder %s16, 3
      %p200 = pnand %p198, %p199
      %p201 = pneg %p200
      // Predicated region
      $region29: #{tpu_custom_call.1} parent=5 // pred_check
        _
      $region30: #{tpu_custom_call.1} parent=5 // pred_check_branch
        %203 = sbr.rel (%p200) target = $region32
      $region31: #{tpu_custom_call.1} parent=5 // pred_region
        %s204 = ssub.s32 %s16, 1
        %s205 = sand.u32 %s41, 1
        %s206 = scalar_lea.sflag [#allocation3], %s205
        %s207 = sand.u32 %s41, 1
        %s208 = smul.addr %s207, 128
        %s209 = scalar_lea.vmem [#allocation2], %s208
        // Predicated region
        $region33: #{tpu_custom_call.1} parent=31 // pred_check
          %p210 = pneg %p54
        $region34: #{tpu_custom_call.1} parent=31 // pred_check_branch
          %212 = sbr.rel (%p210) target = $region36
        $region35: #{tpu_custom_call.1} parent=31 // pred_region
          %213 = dma.done %s206, 2048
        $region36: #{tpu_custom_call.1} parent=31 // pred_fallthru
          _
        // Predicated region
        $region37: #{tpu_custom_call.1} parent=31 // pred_check
          %p214 = pneg %p80
        $region38: #{tpu_custom_call.1} parent=31 // pred_check_branch
          %216 = sbr.rel (%p214) target = $region40
        $region39: #{tpu_custom_call.1} parent=31 // pred_region
          %217 = dma.done [#allocation6], 2048
        $region40: #{tpu_custom_call.1} parent=31 // pred_fallthru
          _
        %s218 = sand.u32 %s41, 1
        %s219 = scalar_lea.sflag [#allocation3], %s218
        %s220 = sand.u32 %s41, 1
        %s221 = smul.addr %s220, 128
        %s222 = scalar_lea.vmem [#allocation2], %s221
        %p223 = pneg %p54
        %p224 = pneg %p51
        %p225 = pneg %p80
        %p226 = pneg %p77
        %s227 = smul.u32 2, %s26
        %p228 = scmp.lt.s32.totalorder %s227, 1
        %s229 = scalar_select %p228, %s227, 1
        %s230 = scalar_lea.vmem %s2, %s229
        %p231 = pneg %p106
        %p232 = pneg %p103
        %p233 = pneg %p134
        %p234 = pneg %p131
        %s235 = sand.u32 %s121, 1
        %s236 = scalar_lea.sflag [#allocation4], %s235
        %s237 = sand.u32 %s121, 1
        %s238 = smul.addr %s237, 512
        %s239 = scalar_lea.vmem [#allocation7], %s238
        %s240 = smul.u32 32, %s25
        %s241 = smul.u32 2, %s26
        %s242 = smul.u32 2, %s26
        %p243 = scmp.lt.s32.totalorder %s242, 1
        %s244 = scalar_select %p243, %s242, 1
        %s245 = scalar_lea.vmem %s2, %s244
        %s246 = smul.u32 2, %s26
        %s247 = smul.u32 32, %s25
        %s248 = smul.u32 2, %s26
        %v250 = vld [vmem:[%s209] sm:$0xf]
        %v251 = vld [vmem:[%s209 + $0x4] sm:$0xf]
        %v252 = vld [vmem:[%s209 + $0x8] sm:$0xf]
        %v253 = vld [vmem:[%s209 + $0xc] sm:$0xf]
        %v254 = vld [vmem:[%s209 + $0x10] sm:$0xf]
        %v255 = vld [vmem:[%s209 + $0x14] sm:$0xf]
        %v256 = vld [vmem:[%s209 + $0x18] sm:$0xf]
        %v257 = vld [vmem:[%s209 + $0x1c] sm:$0xf]
        %v258 = vld [vmem:[%s209 + $0x20] sm:$0xf]
        %v259 = vld [vmem:[%s209 + $0x24] sm:$0xf]
        %v260 = vld [vmem:[%s209 + $0x28] sm:$0xf]
        %v261 = vld [vmem:[%s209 + $0x2c] sm:$0xf]
        %v262 = vld [vmem:[%s209 + $0x30] sm:$0xf]
        %v263 = vld [vmem:[%s209 + $0x34] sm:$0xf]
        %v264 = vld [vmem:[%s209 + $0x38] sm:$0xf]
        %v265 = vld [vmem:[%s209 + $0x3c] sm:$0xf]
        %v266 = vld [vmem:[%s209 + $0x40] sm:$0xf]
        %v267 = vld [vmem:[%s209 + $0x44] sm:$0xf]
        %v268 = vld [vmem:[%s209 + $0x48] sm:$0xf]
        %v269 = vld [vmem:[%s209 + $0x4c] sm:$0xf]
        %v270 = vld [vmem:[%s209 + $0x50] sm:$0xf]
        %v271 = vld [vmem:[%s209 + $0x54] sm:$0xf]
        %v272 = vld [vmem:[%s209 + $0x58] sm:$0xf]
        %v273 = vld [vmem:[%s209 + $0x5c] sm:$0xf]
        %v274 = vld [vmem:[%s209 + $0x60] sm:$0xf]
        %v275 = vld [vmem:[%s209 + $0x64] sm:$0xf]
        %v276 = vld [vmem:[%s209 + $0x68] sm:$0xf]
        %v277 = vld [vmem:[%s209 + $0x6c] sm:$0xf]
        %v278 = vld [vmem:[%s209 + $0x70] sm:$0xf]
        %v279 = vld [vmem:[%s209 + $0x74] sm:$0xf]
        %v280 = vld [vmem:[%s209 + $0x78] sm:$0xf]
        %v281 = vld [vmem:[%s209 + $0x7c] sm:$0xf]
        %v282 = vld [vmem:[#allocation5] sm:$0xff]
        %v283 = vld [vmem:[#allocation5 + $0x8] sm:$0xff]
        %v284 = vld [vmem:[#allocation5 + $0x10] sm:$0xff]
        %v285 = vld [vmem:[#allocation5 + $0x18] sm:$0xff]
        %v286 = vld [vmem:[#allocation5 + $0x20] sm:$0xff]
        %v287 = vld [vmem:[#allocation5 + $0x28] sm:$0xff]
        %v288 = vld [vmem:[#allocation5 + $0x30] sm:$0xff]
        %v289 = vld [vmem:[#allocation5 + $0x38] sm:$0xff]
        %v290 = vld [vmem:[#allocation5 + $0x40] sm:$0xff]
        %v291 = vld [vmem:[#allocation5 + $0x48] sm:$0xff]
        %v292 = vld [vmem:[#allocation5 + $0x50] sm:$0xff]
        %v293 = vld [vmem:[#allocation5 + $0x58] sm:$0xff]
        %v294 = vld [vmem:[#allocation5 + $0x60] sm:$0xff]
        %v295 = vld [vmem:[#allocation5 + $0x68] sm:$0xff]
        %v296 = vld [vmem:[#allocation5 + $0x70] sm:$0xff]
        %v297 = vld [vmem:[#allocation5 + $0x78] sm:$0xff]
        %v298 = vld [vmem:[%s245] sm:$0x3]
        %v300 = vlaneseq
        %v301 = vshrl.u32 %v300, 7
        %v302 = vsub.s32 0, %v301
        %v303 = vrot.slane %v298, %v302
        %v304 = vlaneseq
        %v305 = vshrl.u32 %v304, 7
        %v306 = vsub.s32 1, %v305
        %v307 = vrot.slane %v298, %v306
        %v342 = vunpack.c.l.b16 %v250
        %v343 = vunpack.c.l.b16 %v251
        %v344 = vunpack.c.l.b16 %v252
        %v345 = vunpack.c.l.b16 %v253
        %v346 = vunpack.c.l.b16 %v254
        %v347 = vunpack.c.l.b16 %v255
        %v348 = vunpack.c.l.b16 %v256
        %v349 = vunpack.c.l.b16 %v257
        %v350 = vunpack.c.l.b16 %v258
        %v351 = vunpack.c.l.b16 %v259
        %v352 = vunpack.c.l.b16 %v260
        %v353 = vunpack.c.l.b16 %v261
        %v354 = vunpack.c.l.b16 %v262
        %v355 = vunpack.c.l.b16 %v263
        %v356 = vunpack.c.l.b16 %v264
        %v357 = vunpack.c.l.b16 %v265
        %v358 = vunpack.c.l.b16 %v266
        %v359 = vunpack.c.l.b16 %v267
        %v360 = vunpack.c.l.b16 %v268
        %v361 = vunpack.c.l.b16 %v269
        %v362 = vunpack.c.l.b16 %v270
        %v363 = vunpack.c.l.b16 %v271
        %v364 = vunpack.c.l.b16 %v272
        %v365 = vunpack.c.l.b16 %v273
        %v366 = vunpack.c.l.b16 %v274
        %v367 = vunpack.c.l.b16 %v275
        %v368 = vunpack.c.l.b16 %v276
        %v369 = vunpack.c.l.b16 %v277
        %v370 = vunpack.c.l.b16 %v278
        %v371 = vunpack.c.l.b16 %v279
        %v372 = vunpack.c.l.b16 %v280
        %v373 = vunpack.c.l.b16 %v281
        %v374 = vpack.c.b16 %v343, %v342
        %v375 = vpack.c.b16 %v345, %v344
        %v376 = vpack.c.b16 %v347, %v346
        %v377 = vpack.c.b16 %v349, %v348
        %v378 = vpack.c.b16 %v351, %v350
        %v379 = vpack.c.b16 %v353, %v352
        %v380 = vpack.c.b16 %v355, %v354
        %v381 = vpack.c.b16 %v357, %v356
        %v382 = vpack.c.b16 %v359, %v358
        %v383 = vpack.c.b16 %v361, %v360
        %v384 = vpack.c.b16 %v363, %v362
        %v385 = vpack.c.b16 %v365, %v364
        %v386 = vpack.c.b16 %v367, %v366
        %v387 = vpack.c.b16 %v369, %v368
        %v388 = vpack.c.b16 %v371, %v370
        %v389 = vpack.c.b16 %v373, %v372
        %v422 = vunpack.c.l.b16 %v282
        %v423 = vunpack.c.h.b16 %v282
        %v424 = vunpack.c.l.b16 %v283
        %v425 = vunpack.c.h.b16 %v283
        %v426 = vunpack.c.l.b16 %v284
        %v427 = vunpack.c.h.b16 %v284
        %v428 = vunpack.c.l.b16 %v285
        %v429 = vunpack.c.h.b16 %v285
        %v430 = vunpack.c.l.b16 %v286
        %v431 = vunpack.c.h.b16 %v286
        %v432 = vunpack.c.l.b16 %v287
        %v433 = vunpack.c.h.b16 %v287
        %v434 = vunpack.c.l.b16 %v288
        %v435 = vunpack.c.h.b16 %v288
        %v436 = vunpack.c.l.b16 %v289
        %v437 = vunpack.c.h.b16 %v289
        %v438 = vunpack.c.l.b16 %v290
        %v439 = vunpack.c.h.b16 %v290
        %v440 = vunpack.c.l.b16 %v291
        %v441 = vunpack.c.h.b16 %v291
        %v442 = vunpack.c.l.b16 %v292
        %v443 = vunpack.c.h.b16 %v292
        %v444 = vunpack.c.l.b16 %v293
        %v445 = vunpack.c.h.b16 %v293
        %v446 = vunpack.c.l.b16 %v294
        %v447 = vunpack.c.h.b16 %v294
        %v448 = vunpack.c.l.b16 %v295
        %v449 = vunpack.c.h.b16 %v295
        %v450 = vunpack.c.l.b16 %v296
        %v451 = vunpack.c.h.b16 %v296
        %v452 = vunpack.c.l.b16 %v297
        %v453 = vunpack.c.h.b16 %v297
        %v454 = vpack.c.b16 %v424, %v422
        %v455 = vpack.c.b16 %v425, %v423
        %v456 = vpack.c.b16 %v428, %v426
        %v457 = vpack.c.b16 %v429, %v427
        %v458 = vpack.c.b16 %v432, %v430
        %v459 = vpack.c.b16 %v433, %v431
        %v460 = vpack.c.b16 %v436, %v434
        %v461 = vpack.c.b16 %v437, %v435
        %v462 = vpack.c.b16 %v440, %v438
        %v463 = vpack.c.b16 %v441, %v439
        %v464 = vpack.c.b16 %v444, %v442
        %v465 = vpack.c.b16 %v445, %v443
        %v466 = vpack.c.b16 %v448, %v446
        %v467 = vpack.c.b16 %v449, %v447
        %v468 = vpack.c.b16 %v452, %v450
        %v469 = vpack.c.b16 %v453, %v451
        %486 = vmatprep.subr.bf16.mxu0 %v469
        %487 = vmatpush1.bf16.msra.mxu0 %v468
        %488 = vmatprep.subr.bf16.mxu0 %v467
        %489 = vmatpush1.bf16.msra.mxu0 %v466
        %490 = vmatprep.subr.bf16.mxu0 %v465
        %491 = vmatpush1.bf16.msra.mxu0 %v464
        %492 = vmatprep.subr.bf16.mxu0 %v463
        %493 = vmatpush1.bf16.msra.mxu0 %v462
        %494 = vmatprep.subr.bf16.mxu0 %v461
        %495 = vmatpush1.bf16.msra.mxu0 %v460
        %496 = vmatprep.subr.bf16.mxu0 %v459
        %497 = vmatpush1.bf16.msra.mxu0 %v458
        %498 = vmatprep.subr.bf16.mxu0 %v457
        %499 = vmatpush1.bf16.msra.mxu0 %v456
        %500 = vmatprep.subr.bf16.mxu0 %v455
        %501 = vmatpush1.bf16.msra.mxu0 %v454
        %502 = vmatprep.subr.bf16.mxu0 0
        %503 = vmatpush2.bf16.msra.mxu0 0
        %504 = vmatprep.subr.bf16.mxu0 0
        %505 = vmatpush2.bf16.msra.mxu0 0
        %506 = vmatprep.subr.bf16.mxu0 0
        %507 = vmatpush2.bf16.msra.mxu0 0
        %508 = vmatprep.subr.bf16.mxu0 0
        %509 = vmatpush2.bf16.msra.mxu0 0
        %510 = vmatprep.subr.bf16.mxu0 0
        %511 = vmatpush2.bf16.msra.mxu0 0
        %512 = vmatprep.subr.bf16.mxu0 0
        %513 = vmatpush2.bf16.msra.mxu0 0
        %514 = vmatprep.subr.bf16.mxu0 0
        %515 = vmatpush2.bf16.msra.mxu0 0
        %516 = vmatprep.subr.bf16.mxu0 0
        %517 = vmatpush2.bf16.msra.mxu0 0
        %518 = vmatprep.mubr.bf16.mxu0 0
        %519 = vmatmul.mubr.bf16.gmra.mxu0 %v374
        %v520 = vpop.f32.mrf.mxu0
        %v521 = vadd.f32 %v303, %v520
        %v522 = vpop.f32.mrf.mxu0
        %v523 = vadd.f32 %v307, %v522
        %v524 = vpop.f32.mrf.mxu0
        %v525 = vadd.f32 %v303, %v524
        %v526 = vpop.f32.mrf.mxu0
        %v527 = vadd.f32 %v307, %v526
        %528 = vmatprep.mubr.bf16.mxu0 0
        %529 = vmatmul.mubr.bf16.gmra.mxu0 %v375
        %v530 = vpop.f32.mrf.mxu0
        %v531 = vadd.f32 %v303, %v530
        %v532 = vpop.f32.mrf.mxu0
        %v533 = vadd.f32 %v307, %v532
        %v534 = vpop.f32.mrf.mxu0
        %v535 = vadd.f32 %v303, %v534
        %v536 = vpop.f32.mrf.mxu0
        %v537 = vadd.f32 %v307, %v536
        %538 = vmatprep.mubr.bf16.mxu0 0
        %539 = vmatmul.mubr.bf16.gmra.mxu0 %v376
        %v540 = vpop.f32.mrf.mxu0
        %v541 = vadd.f32 %v303, %v540
        %v542 = vpop.f32.mrf.mxu0
        %v543 = vadd.f32 %v307, %v542
        %v544 = vpop.f32.mrf.mxu0
        %v545 = vadd.f32 %v303, %v544
        %v546 = vpop.f32.mrf.mxu0
        %v547 = vadd.f32 %v307, %v546
        %548 = vmatprep.mubr.bf16.mxu0 0
        %549 = vmatmul.mubr.bf16.gmra.mxu0 %v377
        %v550 = vpop.f32.mrf.mxu0
        %v551 = vadd.f32 %v303, %v550
        %v552 = vpop.f32.mrf.mxu0
        %v553 = vadd.f32 %v307, %v552
        %v554 = vpop.f32.mrf.mxu0
        %v555 = vadd.f32 %v303, %v554
        %v556 = vpop.f32.mrf.mxu0
        %v557 = vadd.f32 %v307, %v556
        %558 = vmatprep.mubr.bf16.mxu0 0
        %559 = vmatmul.mubr.bf16.gmra.mxu0 %v378
        %v560 = vpop.f32.mrf.mxu0
        %v561 = vadd.f32 %v303, %v560
        %v562 = vpop.f32.mrf.mxu0
        %v563 = vadd.f32 %v307, %v562
        %v564 = vpop.f32.mrf.mxu0
        %v565 = vadd.f32 %v303, %v564
        %v566 = vpop.f32.mrf.mxu0
        %v567 = vadd.f32 %v307, %v566
        %568 = vmatprep.mubr.bf16.mxu0 0
        %569 = vmatmul.mubr.bf16.gmra.mxu0 %v379
        %v570 = vpop.f32.mrf.mxu0
        %v571 = vadd.f32 %v303, %v570
        %v572 = vpop.f32.mrf.mxu0
        %v573 = vadd.f32 %v307, %v572
        %v574 = vpop.f32.mrf.mxu0
        %v575 = vadd.f32 %v303, %v574
        %v576 = vpop.f32.mrf.mxu0
        %v577 = vadd.f32 %v307, %v576
        %578 = vmatprep.mubr.bf16.mxu0 0
        %579 = vmatmul.mubr.bf16.gmra.mxu0 %v380
        %v580 = vpop.f32.mrf.mxu0
        %v581 = vadd.f32 %v303, %v580
        %v582 = vpop.f32.mrf.mxu0
        %v583 = vadd.f32 %v307, %v582
        %v584 = vpop.f32.mrf.mxu0
        %v585 = vadd.f32 %v303, %v584
        %v586 = vpop.f32.mrf.mxu0
        %v587 = vadd.f32 %v307, %v586
        %588 = vmatprep.mubr.bf16.mxu0 0
        %589 = vmatmul.mubr.bf16.gmra.mxu0 %v381
        %v590 = vpop.f32.mrf.mxu0
        %v591 = vadd.f32 %v303, %v590
        %v592 = vpop.f32.mrf.mxu0
        %v593 = vadd.f32 %v307, %v592
        %v594 = vpop.f32.mrf.mxu0
        %v595 = vadd.f32 %v303, %v594
        %v596 = vpop.f32.mrf.mxu0
        %v597 = vadd.f32 %v307, %v596
        %598 = vmatprep.mubr.bf16.mxu0 0
        %599 = vmatmul.mubr.bf16.gmra.mxu0 %v382
        %v600 = vpop.f32.mrf.mxu0
        %v601 = vadd.f32 %v303, %v600
        %v602 = vpop.f32.mrf.mxu0
        %v603 = vadd.f32 %v307, %v602
        %v604 = vpop.f32.mrf.mxu0
        %v605 = vadd.f32 %v303, %v604
        %v606 = vpop.f32.mrf.mxu0
        %v607 = vadd.f32 %v307, %v606
        %608 = vmatprep.mubr.bf16.mxu0 0
        %609 = vmatmul.mubr.bf16.gmra.mxu0 %v383
        %v610 = vpop.f32.mrf.mxu0
        %v611 = vadd.f32 %v303, %v610
        %v612 = vpop.f32.mrf.mxu0
        %v613 = vadd.f32 %v307, %v612
        %v614 = vpop.f32.mrf.mxu0
        %v615 = vadd.f32 %v303, %v614
        %v616 = vpop.f32.mrf.mxu0
        %v617 = vadd.f32 %v307, %v616
        %618 = vmatprep.mubr.bf16.mxu0 0
        %619 = vmatmul.mubr.bf16.gmra.mxu0 %v384
        %v620 = vpop.f32.mrf.mxu0
        %v621 = vadd.f32 %v303, %v620
        %v622 = vpop.f32.mrf.mxu0
        %v623 = vadd.f32 %v307, %v622
        %v624 = vpop.f32.mrf.mxu0
        %v625 = vadd.f32 %v303, %v624
        %v626 = vpop.f32.mrf.mxu0
        %v627 = vadd.f32 %v307, %v626
        %628 = vmatprep.mubr.bf16.mxu0 0
        %629 = vmatmul.mubr.bf16.gmra.mxu0 %v385
        %v630 = vpop.f32.mrf.mxu0
        %v631 = vadd.f32 %v303, %v630
        %v632 = vpop.f32.mrf.mxu0
        %v633 = vadd.f32 %v307, %v632
        %v634 = vpop.f32.mrf.mxu0
        %v635 = vadd.f32 %v303, %v634
        %v636 = vpop.f32.mrf.mxu0
        %v637 = vadd.f32 %v307, %v636
        %638 = vmatprep.mubr.bf16.mxu0 0
        %639 = vmatmul.mubr.bf16.gmra.mxu0 %v386
        %v640 = vpop.f32.mrf.mxu0
        %v641 = vadd.f32 %v303, %v640
        %v642 = vpop.f32.mrf.mxu0
        %v643 = vadd.f32 %v307, %v642
        %v644 = vpop.f32.mrf.mxu0
        %v645 = vadd.f32 %v303, %v644
        %v646 = vpop.f32.mrf.mxu0
        %v647 = vadd.f32 %v307, %v646
        %648 = vmatprep.mubr.bf16.mxu0 0
        %649 = vmatmul.mubr.bf16.gmra.mxu0 %v387
        %v650 = vpop.f32.mrf.mxu0
        %v651 = vadd.f32 %v303, %v650
        %v652 = vpop.f32.mrf.mxu0
        %v653 = vadd.f32 %v307, %v652
        %v654 = vpop.f32.mrf.mxu0
        %v655 = vadd.f32 %v303, %v654
        %v656 = vpop.f32.mrf.mxu0
        %v657 = vadd.f32 %v307, %v656
        %658 = vmatprep.mubr.bf16.mxu0 0
        %659 = vmatmul.mubr.bf16.gmra.mxu0 %v388
        %v660 = vpop.f32.mrf.mxu0
        %v661 = vadd.f32 %v303, %v660
        %v662 = vpop.f32.mrf.mxu0
        %v663 = vadd.f32 %v307, %v662
        %v664 = vpop.f32.mrf.mxu0
        %v665 = vadd.f32 %v303, %v664
        %v666 = vpop.f32.mrf.mxu0
        %v667 = vadd.f32 %v307, %v666
        %668 = vmatprep.mubr.bf16.mxu0 0
        %669 = vmatmul.mubr.bf16.gmra.mxu0 %v389
        %v670 = vpop.f32.mrf.mxu0
        %v671 = vadd.f32 %v303, %v670
        %v672 = vpop.f32.mrf.mxu0
        %v673 = vadd.f32 %v307, %v672
        %v674 = vpop.f32.mrf.mxu0
        %v675 = vadd.f32 %v303, %v674
        %v676 = vpop.f32.mrf.mxu0
        %v677 = vadd.f32 %v307, %v676
        %678 = vdwg.mxu0
        %v679 = vmax.f32 %v521, 0.0
        %v680 = vmax.f32 %v523, 0.0
        %v681 = vmax.f32 %v525, 0.0
        %v682 = vmax.f32 %v527, 0.0
        %v683 = vmax.f32 %v531, 0.0
        %v684 = vmax.f32 %v533, 0.0
        %v685 = vmax.f32 %v535, 0.0
        %v686 = vmax.f32 %v537, 0.0
        %v687 = vmax.f32 %v541, 0.0
        %v688 = vmax.f32 %v543, 0.0
        %v689 = vmax.f32 %v545, 0.0
        %v690 = vmax.f32 %v547, 0.0
        %v691 = vmax.f32 %v551, 0.0
        %v692 = vmax.f32 %v553, 0.0
        %v693 = vmax.f32 %v555, 0.0
        %v694 = vmax.f32 %v557, 0.0
        %v695 = vmax.f32 %v561, 0.0
        %v696 = vmax.f32 %v563, 0.0
        %v697 = vmax.f32 %v565, 0.0
        %v698 = vmax.f32 %v567, 0.0
        %v699 = vmax.f32 %v571, 0.0
        %v700 = vmax.f32 %v573, 0.0
        %v701 = vmax.f32 %v575, 0.0
        %v702 = vmax.f32 %v577, 0.0
        %v703 = vmax.f32 %v581, 0.0
        %v704 = vmax.f32 %v583, 0.0
        %v705 = vmax.f32 %v585, 0.0
        %v706 = vmax.f32 %v587, 0.0
        %v707 = vmax.f32 %v591, 0.0
        %v708 = vmax.f32 %v593, 0.0
        %v709 = vmax.f32 %v595, 0.0
        %v710 = vmax.f32 %v597, 0.0
        %v711 = vmax.f32 %v601, 0.0
        %v712 = vmax.f32 %v603, 0.0
        %v713 = vmax.f32 %v605, 0.0
        %v714 = vmax.f32 %v607, 0.0
        %v715 = vmax.f32 %v611, 0.0
        %v716 = vmax.f32 %v613, 0.0
        %v717 = vmax.f32 %v615, 0.0
        %v718 = vmax.f32 %v617, 0.0
        %v719 = vmax.f32 %v621, 0.0
        %v720 = vmax.f32 %v623, 0.0
        %v721 = vmax.f32 %v625, 0.0
        %v722 = vmax.f32 %v627, 0.0
        %v723 = vmax.f32 %v631, 0.0
        %v724 = vmax.f32 %v633, 0.0
        %v725 = vmax.f32 %v635, 0.0
        %v726 = vmax.f32 %v637, 0.0
        %v727 = vmax.f32 %v641, 0.0
        %v728 = vmax.f32 %v643, 0.0
        %v729 = vmax.f32 %v645, 0.0
        %v730 = vmax.f32 %v647, 0.0
        %v731 = vmax.f32 %v651, 0.0
        %v732 = vmax.f32 %v653, 0.0
        %v733 = vmax.f32 %v655, 0.0
        %v734 = vmax.f32 %v657, 0.0
        %v735 = vmax.f32 %v661, 0.0
        %v736 = vmax.f32 %v663, 0.0
        %v737 = vmax.f32 %v665, 0.0
        %v738 = vmax.f32 %v667, 0.0
        %v739 = vmax.f32 %v671, 0.0
        %v740 = vmax.f32 %v673, 0.0
        %v741 = vmax.f32 %v675, 0.0
        %v742 = vmax.f32 %v677, 0.0
        %743 = vst [vmem:[%s239] sm:$0xff] %v679
        %744 = vst [vmem:[%s239 + $0x8] sm:$0xff] %v680
        %745 = vst [vmem:[%s239 + $0x10] sm:$0xff] %v681
        %746 = vst [vmem:[%s239 + $0x18] sm:$0xff] %v682
        %747 = vst [vmem:[%s239 + $0x20] sm:$0xff] %v683
        %748 = vst [vmem:[%s239 + $0x28] sm:$0xff] %v684
        %749 = vst [vmem:[%s239 + $0x30] sm:$0xff] %v685
        %750 = vst [vmem:[%s239 + $0x38] sm:$0xff] %v686
        %751 = vst [vmem:[%s239 + $0x40] sm:$0xff] %v687
        %752 = vst [vmem:[%s239 + $0x48] sm:$0xff] %v688
        %753 = vst [vmem:[%s239 + $0x50] sm:$0xff] %v689
        %754 = vst [vmem:[%s239 + $0x58] sm:$0xff] %v690
        %755 = vst [vmem:[%s239 + $0x60] sm:$0xff] %v691
        %756 = vst [vmem:[%s239 + $0x68] sm:$0xff] %v692
        %757 = vst [vmem:[%s239 + $0x70] sm:$0xff] %v693
        %758 = vst [vmem:[%s239 + $0x78] sm:$0xff] %v694
        %759 = vst [vmem:[%s239 + $0x80] sm:$0xff] %v695
        %760 = vst [vmem:[%s239 + $0x88] sm:$0xff] %v696
        %761 = vst [vmem:[%s239 + $0x90] sm:$0xff] %v697
        %762 = vst [vmem:[%s239 + $0x98] sm:$0xff] %v698
        %763 = vst [vmem:[%s239 + $0xa0] sm:$0xff] %v699
        %764 = vst [vmem:[%s239 + $0xa8] sm:$0xff] %v700
        %765 = vst [vmem:[%s239 + $0xb0] sm:$0xff] %v701
        %766 = vst [vmem:[%s239 + $0xb8] sm:$0xff] %v702
        %767 = vst [vmem:[%s239 + $0xc0] sm:$0xff] %v703
        %768 = vst [vmem:[%s239 + $0xc8] sm:$0xff] %v704
        %769 = vst [vmem:[%s239 + $0xd0] sm:$0xff] %v705
        %770 = vst [vmem:[%s239 + $0xd8] sm:$0xff] %v706
        %771 = vst [vmem:[%s239 + $0xe0] sm:$0xff] %v707
        %772 = vst [vmem:[%s239 + $0xe8] sm:$0xff] %v708
        %773 = vst [vmem:[%s239 + $0xf0] sm:$0xff] %v709
        %774 = vst [vmem:[%s239 + $0xf8] sm:$0xff] %v710
        %775 = vst [vmem:[%s239 + $0x100] sm:$0xff] %v711
        %776 = vst [vmem:[%s239 + $0x108] sm:$0xff] %v712
        %777 = vst [vmem:[%s239 + $0x110] sm:$0xff] %v713
        %778 = vst [vmem:[%s239 + $0x118] sm:$0xff] %v714
        %779 = vst [vmem:[%s239 + $0x120] sm:$0xff] %v715
        %780 = vst [vmem:[%s239 + $0x128] sm:$0xff] %v716
        %781 = vst [vmem:[%s239 + $0x130] sm:$0xff] %v717
        %782 = vst [vmem:[%s239 + $0x138] sm:$0xff] %v718
        %783 = vst [vmem:[%s239 + $0x140] sm:$0xff] %v719
        %784 = vst [vmem:[%s239 + $0x148] sm:$0xff] %v720
        %785 = vst [vmem:[%s239 + $0x150] sm:$0xff] %v721
        %786 = vst [vmem:[%s239 + $0x158] sm:$0xff] %v722
        %787 = vst [vmem:[%s239 + $0x160] sm:$0xff] %v723
        %788 = vst [vmem:[%s239 + $0x168] sm:$0xff] %v724
        %789 = vst [vmem:[%s239 + $0x170] sm:$0xff] %v725
        %790 = vst [vmem:[%s239 + $0x178] sm:$0xff] %v726
        %791 = vst [vmem:[%s239 + $0x180] sm:$0xff] %v727
        %792 = vst [vmem:[%s239 + $0x188] sm:$0xff] %v728
        %793 = vst [vmem:[%s239 + $0x190] sm:$0xff] %v729
        %794 = vst [vmem:[%s239 + $0x198] sm:$0xff] %v730
        %795 = vst [vmem:[%s239 + $0x1a0] sm:$0xff] %v731
        %796 = vst [vmem:[%s239 + $0x1a8] sm:$0xff] %v732
        %797 = vst [vmem:[%s239 + $0x1b0] sm:$0xff] %v733
        %798 = vst [vmem:[%s239 + $0x1b8] sm:$0xff] %v734
        %799 = vst [vmem:[%s239 + $0x1c0] sm:$0xff] %v735
        %800 = vst [vmem:[%s239 + $0x1c8] sm:$0xff] %v736
        %801 = vst [vmem:[%s239 + $0x1d0] sm:$0xff] %v737
        %802 = vst [vmem:[%s239 + $0x1d8] sm:$0xff] %v738
        %803 = vst [vmem:[%s239 + $0x1e0] sm:$0xff] %v739
        %804 = vst [vmem:[%s239 + $0x1e8] sm:$0xff] %v740
        %805 = vst [vmem:[%s239 + $0x1f0] sm:$0xff] %v741
        %806 = vst [vmem:[%s239 + $0x1f8] sm:$0xff] %v742
        %s807 = sand.u32 %s121, 1
        %s808 = scalar_lea.sflag [#allocation4], %s807
        %s809 = sand.u32 %s121, 1
        %s810 = smul.addr %s809, 512
        %s811 = scalar_lea.vmem [#allocation7], %s810
        // Predicated region
        $region41: #{tpu_custom_call.1} parent=31 // pred_check
          %p812 = pneg %p131
        $region42: #{tpu_custom_call.1} parent=31 // pred_check_branch
          %814 = sbr.rel (%p812) target = $region44
        $region43: #{tpu_custom_call.1} parent=31 // pred_region
          %s815 = smul.u32 32, %s25
          %s816 = smul.u32 2, %s26
          %s818 = ssub.s32 8192, 8192
          %819 = vsyncadd %s808, %s818
          %s820 = smul.addr %s815, 2
          %s821 = sadd.s32 %s816, %s820
          %s822 = smul.addr %s821, 128
          %s823 = scalar_lea.hbm %s3, %s822
          %s824 = sshll.u32 %s811, 4
          %s825 = int_to_ptr.vmem [resolvable:$true] %s824
          %830 = dma.vmem_to_hbm [thread:$0]  %s825, 8192, %s823, %s808, 256, 256, 16
        $region44: #{tpu_custom_call.1} parent=31 // pred_fallthru
          _
      $region32: #{tpu_custom_call.1} parent=5 // pred_fallthru
        _
      %p831 = scmp.le.s32.totalorder 2, %s16
      // Predicated region
      $region45: #{tpu_custom_call.1} parent=5 // pred_check
        %p832 = pneg %p831
      $region46: #{tpu_custom_call.1} parent=5 // pred_check_branch
        %834 = sbr.rel (%p832) target = $region48
      $region47: #{tpu_custom_call.1} parent=5 // pred_region
        %s835 = ssub.s32 %s16, 2
        // Predicated region
        $region49: #{tpu_custom_call.1} parent=47 // pred_check
          %p836 = pneg %p137
        $region50: #{tpu_custom_call.1} parent=47 // pred_check_branch
          %838 = sbr.rel (%p836) target = $region52
        $region51: #{tpu_custom_call.1} parent=47 // pred_region
          %s839 = sand.u32 %s122, 1
          %s840 = scalar_lea.sflag [#allocation4], %s839
          %s841 = sand.u32 %s122, 1
          %s842 = smul.addr %s841, 512
          %s843 = scalar_lea.vmem [#allocation7], %s842
          %844 = dma.done %s840, 8192
        $region52: #{tpu_custom_call.1} parent=47 // pred_fallthru
          _
      $region48: #{tpu_custom_call.1} parent=5 // pred_fallthru
        _
    $region6: #{tpu_custom_call.1} parent=1 // loop_footer
      %s20 = sadd.s32 1, %s16
    $region7: #{tpu_custom_call.1} parent=1 // loop_footer_branch
      %15 = sbr.rel target = $region3
    $region8: #{tpu_custom_call.1} parent=1 // loop_exit
      _
    %845 = vsyncpa [#allocation3], 1
    %s846 = scalar_lea.sflag [#allocation3], 1
    %847 = vsyncpa %s846, 1
    %848 = vsyncpa [#allocation6], 1
    %849 = vsyncpa [#allocation4], 1
    %s850 = scalar_lea.sflag [#allocation4], 1
    %851 = vsyncpa %s850, 1

// kernel: tpu_custom_call.1
$region0: #{tpu_custom_call.1}
  #allocation0 [shape = 'u32[]', space=smem, size = 0x4, offset = 0x4, fixed_abs, tag = 'smem constant byte address 0x4 - core index']
  #allocation1 [shape = 'u32[144,128]{1,0:T(1,128)}', space=vmem, size = 0x12000, scoped, tag = 'internal scratch']
  %s0 = inlined_call_operand.hbm [shape: bf16[512,128], index: 0, kind: input, shape index: {}]
  %s1 = inlined_call_operand.hbm [shape: bf16[128,256], index: 1, kind: input, shape index: {}]
  %s2 = inlined_call_operand.vmem [shape: f32[1,256], index: 2, kind: input, shape index: {}]
  %s3 = inlined_call_operand.hbm [shape: f32[512,256], index: 3, kind: output, shape index: {}]
  %s4 = sld [smem:[#allocation0]]
  $region53: #{tpu_custom_call.1} parent=0
    _
  %s6 = ssub.s32 1, %s4
  %s7 = scalar_select 0, %s6, %s4
  $region1: #{tpu_custom_call.1} parent=0
    #allocation2 [shape = 'u8[131072]{0}', space=vmem, size = 0x20000, scoped, tag = 'input window, operand 0']
    #allocation3 [shape = 's32[2]{0}', space=sflag, size = 0x8, scoped, tag = 'scoped memory for tpu_custom_call.1']
    #allocation4 [shape = 's32[2]{0}', space=sflag, size = 0x8, scoped, tag = 'scoped memory for tpu_custom_call.1']
    #allocation5 [shape = 'u8[65536]{0}', space=vmem, size = 0x10000, scoped, tag = 'input window, operand 1, single buffered']
    #allocation6 [shape = 's32[1]{0}', space=sflag, size = 0x4, scoped, tag = 'scoped memory for tpu_custom_call.1']
    #allocation7 [shape = 'u8[524288]{0}', space=vmem, size = 0x80000, scoped, tag = 'output window, operand 0']
    %8 = vsyncpa [#allocation3], 0
    %s9 = scalar_lea.sflag [#allocation3], 1
    %10 = vsyncpa %s9, 0
    %11 = vsyncpa [#allocation6], 0
    %12 = vsyncpa [#allocation4], 0
    %s13 = scalar_lea.sflag [#allocation4], 1
    %14 = vsyncpa %s13, 0
    loop: start=0, step=1, limit=4
    $region2: #{tpu_custom_call.1} parent=1 // loop_pre_header
      _
    $region3: #{tpu_custom_call.1} parent=1 // loop_header
      %s16 = sphi 0, %s20
      %p17 = scmp.ge.s32.totalorder %s16, 4
      %s23 = sphi 0, %s35
      %s24 = sphi 0, %s31
      %s25 = sphi 0, %s23
      %s26 = sphi 0, %s24
      %s27 = sphi 0, %s25
      %s28 = sphi 0, %s26
      %s38 = sphi 0, %s40
      %s41 = sphi 0, %s38
      %s42 = sphi 0, %s41
      %s58 = sphi 0, %s42
      %s64 = sphi 0, %s66
      %s67 = sphi 0, %s64
      %s68 = sphi 0, %s67
      %s84 = sphi 0, %s68
      %s90 = sphi 0, %s92
      %s93 = sphi 0, %s90
      %s94 = sphi 0, %s93
      %s110 = sphi 0, %s94
      %s118 = sphi 0, %s120
      %s121 = sphi 0, %s118
      %s122 = sphi 0, %s121
      %s138 = sphi 0, %s122
    $region4: #{tpu_custom_call.1} parent=1 // loop_header_branch
      %19 = sbr.rel (%p17) target = $region8
    $region5: #{tpu_custom_call.1} parent=1 // loop_body
      %s21 = ssub.s32 %s16, 1
      %s22 = ssub.s32 %s16, 2
      %s29 = sadd.s32 1, %s24
      %p30 = scmp.ge.s32.totalorder %s29, 1
      %s31 = scalar_select %p30, 0, %s29
      %s32 = sadd.s32 1, %s23
      %s33 = scalar_select %p30, %s32, %s23
      %p34 = scmp.ge.s32.totalorder %s33, 2
      %s35 = scalar_select %p34, 0, %s33
      %s36 = ssub.s32 %s23, %s35
      %p37 = scmp.eq.s32.totalorder %s36, 0
      %s39 = sadd.s32 %s38, 1
      %s40 = scalar_select %p37, %s38, %s39
      %p43 = pneg %p37
      %p44 = scmp.eq.s32.totalorder %s16, 1
      %p45 = por %p43, %p44
      %p46 = scmp.ne.s32.totalorder %s38, %s41
      %p47 = scmp.eq.s32.totalorder %s16, 0
      %p48 = por %p46, %p47
      %p49 = scmp.ne.s32.totalorder %s38, %s41
      %p50 = scmp.eq.s32.totalorder %s21, 1
      %p51 = por %p49, %p50
      %p52 = scmp.ne.s32.totalorder %s41, %s42
      %p53 = scmp.eq.s32.totalorder %s21, 0
      %p54 = por %p52, %p53
      %p55 = scmp.ne.s32.totalorder %s41, %s42
      %p56 = scmp.eq.s32.totalorder %s22, 1
      %p57 = por %p55, %p56
      %p59 = scmp.ne.s32.totalorder %s42, %s58
      %p60 = scmp.eq.s32.totalorder %s22, 0
      %p61 = por %p59, %p60
      %s62 = ssub.s32 %s24, %s31
      %p63 = scmp.eq.s32.totalorder %s62, 0
      %s65 = sadd.s32 %s64, 1
      %s66 = scalar_select %p63, %s64, %s65
      %p69 = pneg %p63
      %p70 = scmp.eq.s32.totalorder %s16, 1
      %p71 = por %p69, %p70
      %p72 = scmp.ne.s32.totalorder %s64, %s67
      %p73 = scmp.eq.s32.totalorder %s16, 0
      %p74 = por %p72, %p73
      %p75 = scmp.ne.s32.totalorder %s64, %s67
      %p76 = scmp.eq.s32.totalorder %s21, 1
      %p77 = por %p75, %p76
      %p78 = scmp.ne.s32.totalorder %s67, %s68
      %p79 = scmp.eq.s32.totalorder %s21, 0
      %p80 = por %p78, %p79
      %p81 = scmp.ne.s32.totalorder %s67, %s68
      %p82 = scmp.eq.s32.totalorder %s22, 1
      %p83 = por %p81, %p82
      %p85 = scmp.ne.s32.totalorder %s68, %s84
      %p86 = scmp.eq.s32.totalorder %s22, 0
      %p87 = por %p85, %p86
      %s88 = ssub.s32 %s24, %s31
      %p89 = scmp.eq.s32.totalorder %s88, 0
      %s91 = sadd.s32 %s90, 1
      %s92 = scalar_select %p89, %s90, %s91
      %p95 = pneg %p89
      %p96 = scmp.eq.s32.totalorder %s16, 1
      %p97 = por %p95, %p96
      %p98 = scmp.ne.s32.totalorder %s90, %s93
      %p99 = scmp.eq.s32.totalorder %s16, 0
      %p100 = por %p98, %p99
      %p101 = scmp.ne.s32.totalorder %s90, %s93
      %p102 = scmp.eq.s32.totalorder %s21, 1
      %p103 = por %p101, %p102
      %p104 = scmp.ne.s32.totalorder %s93, %s94
      %p105 = scmp.eq.s32.totalorder %s21, 0
      %p106 = por %p104, %p105
      %p107 = scmp.ne.s32.totalorder %s93, %s94
      %p108 = scmp.eq.s32.totalorder %s22, 1
      %p109 = por %p107, %p108
      %p111 = scmp.ne.s32.totalorder %s94, %s110
      %p112 = scmp.eq.s32.totalorder %s22, 0
      %p113 = por %p111, %p112
      %s114 = ssub.s32 %s23, %s35
      %s115 = ssub.s32 %s24, %s31
      %s116 = sor.u32 %s114, %s115
      %p117 = scmp.eq.s32.totalorder %s116, 0
      %s119 = sadd.s32 %s118, 1
      %s120 = scalar_select %p117, %s118, %s119
      %p123 = pneg %p117
      %p124 = scmp.eq.s32.totalorder %s16, 1
      %p125 = por %p123, %p124
      %p126 = scmp.ne.s32.totalorder %s118, %s121
      %p127 = scmp.eq.s32.totalorder %s16, 0
      %p128 = por %p126, %p127
      %p129 = scmp.ne.s32.totalorder %s118, %s121
      %p130 = scmp.eq.s32.totalorder %s21, 1
      %p131 = por %p129, %p130
      %p132 = scmp.ne.s32.totalorder %s121, %s122
      %p133 = scmp.eq.s32.totalorder %s21, 0
      %p134 = por %p132, %p133
      %p135 = scmp.ne.s32.totalorder %s121, %s122
      %p136 = scmp.eq.s32.totalorder %s22, 1
      %p137 = por %p135, %p136
      %p139 = scmp.ne.s32.totalorder %s122, %s138
      %p140 = scmp.eq.s32.totalorder %s22, 0
      %p141 = por %p139, %p140
      %p142 = scmp.le.s32.totalorder 1, %s16
      %p143 = scmp.lt.s32.totalorder %s16, 3
      %p144 = pnand %p142, %p143
      %p145 = pneg %p144
      // Predicated region
      $region9: #{tpu_custom_call.1} parent=5 // pred_check
        _
      $region10: #{tpu_custom_call.1} parent=5 // pred_check_branch
        %147 = sbr.rel (%p144) target = $region12
      $region11: #{tpu_custom_call.1} parent=5 // pred_region
        %s148 = ssub.s32 %s16, 1
        // Predicated region
        $region13: #{tpu_custom_call.1} parent=11 // pred_check
          %p149 = pneg %p80
        $region14: #{tpu_custom_call.1} parent=11 // pred_check_branch
          %151 = sbr.rel (%p149) target = $region16
        $region15: #{tpu_custom_call.1} parent=11 // pred_region
          %s152 = smul.u32 2, %s26
          %s154 = ssub.s32 2048, 2048
          %155 = vsyncadd [#allocation6], %s154
          %s156 = smul.addr %s152, 64
          %s157 = scalar_lea.hbm %s1, %s156
          %s158 = sshll.u32 [#allocation5], 4
          %s159 = int_to_ptr.vmem [resolvable:$true] %s158
          %164 = dma.hbm_to_vmem [thread:$0]  %s157, 2048, %s159, [#allocation6], 128, 128, 8
        $region16: #{tpu_custom_call.1} parent=11 // pred_fallthru
          _
        // Predicated region
        $region17: #{tpu_custom_call.1} parent=11 // pred_check
          %p165 = pneg %p106
        $region18: #{tpu_custom_call.1} parent=11 // pred_check_branch
          %167 = sbr.rel (%p165) target = $region20
        $region19: #{tpu_custom_call.1} parent=11 // pred_region
          %s168 = smul.u32 2, %s26
          %p169 = scmp.lt.s32.totalorder %s168, 1
          %s170 = scalar_select %p169, %s168, 1
          %s171 = scalar_lea.vmem %s2, %s170
          %s172 = smul.u32 2, %s26
        $region20: #{tpu_custom_call.1} parent=11 // pred_fallthru
          _
      $region12: #{tpu_custom_call.1} parent=5 // pred_fallthru
        _
      %p173 = scmp.lt.s32.totalorder %s16, 2
      // Predicated region
      $region21: #{tpu_custom_call.1} parent=5 // pred_check
        %p174 = pneg %p173
      $region22: #{tpu_custom_call.1} parent=5 // pred_check_branch
        %176 = sbr.rel (%p174) target = $region24
      $region23: #{tpu_custom_call.1} parent=5 // pred_region
        // Predicated region
        $region25: #{tpu_custom_call.1} parent=23 // pred_check
          %p177 = pneg %p48
        $region26: #{tpu_custom_call.1} parent=23 // pred_check_branch
          %179 = sbr.rel (%p177) target = $region28
        $region27: #{tpu_custom_call.1} parent=23 // pred_region
          %s180 = sand.u32 %s38, 1
          %s181 = scalar_lea.sflag [#allocation3], %s180
          %s182 = sand.u32 %s38, 1
          %s183 = smul.addr %s182, 128
          %s184 = scalar_lea.vmem [#allocation2], %s183
          %s185 = smul.u32 32, %s23
          %s187 = ssub.s32 2048, 2048
          %188 = vsyncadd %s181, %s187
          %s189 = smul.addr %s185, 64
          %s190 = scalar_lea.hbm %s0, %s189
          %s191 = sshll.u32 %s184, 4
          %s192 = int_to_ptr.vmem [resolvable:$true] %s191
          %197 = dma.hbm_to_vmem [thread:$0]  %s190, 2048, %s192, %s181, 64, 64, 4
        $region28: #{tpu_custom_call.1} parent=23 // pred_fallthru
          _
      $region24: #{tpu_custom_call.1} parent=5 // pred_fallthru
        _
      %p198 = scmp.le.s32.totalorder 1, %s16
      %p199 = scmp.lt.s32.totalorder %s16, 3
      %p200 = pnand %p198, %p199
      %p201 = pneg %p200
      // Predicated region
      $region29: #{tpu_custom_call.1} parent=5 // pred_check
        _
      $region30: #{tpu_custom_call.1} parent=5 // pred_check_branch
        %203 = sbr.rel (%p200) target = $region32
      $region31: #{tpu_custom_call.1} parent=5 // pred_region
        %s204 = ssub.s32 %s16, 1
        %s205 = sand.u32 %s41, 1
        %s206 = scalar_lea.sflag [#allocation3], %s205
        %s207 = sand.u32 %s41, 1
        %s208 = smul.addr %s207, 128
        %s209 = scalar_lea.vmem [#allocation2], %s208
        // Predicated region
        $region33: #{tpu_custom_call.1} parent=31 // pred_check
          %p210 = pneg %p54
        $region34: #{tpu_custom_call.1} parent=31 // pred_check_branch
          %212 = sbr.rel (%p210) target = $region36
        $region35: #{tpu_custom_call.1} parent=31 // pred_region
          %213 = dma.done %s206, 2048
        $region36: #{tpu_custom_call.1} parent=31 // pred_fallthru
          _
        // Predicated region
        $region37: #{tpu_custom_call.1} parent=31 // pred_check
          %p214 = pneg %p80
        $region38: #{tpu_custom_call.1} parent=31 // pred_check_branch
          %216 = sbr.rel (%p214) target = $region40
        $region39: #{tpu_custom_call.1} parent=31 // pred_region
          %217 = dma.done [#allocation6], 2048
        $region40: #{tpu_custom_call.1} parent=31 // pred_fallthru
          _
        %s218 = sand.u32 %s41, 1
        %s219 = scalar_lea.sflag [#allocation3], %s218
        %s220 = sand.u32 %s41, 1
        %s221 = smul.addr %s220, 128
        %s222 = scalar_lea.vmem [#allocation2], %s221
        %p223 = pneg %p54
        %p224 = pneg %p51
        %p225 = pneg %p80
        %p226 = pneg %p77
        %s227 = smul.u32 2, %s26
        %p228 = scmp.lt.s32.totalorder %s227, 1
        %s229 = scalar_select %p228, %s227, 1
        %s230 = scalar_lea.vmem %s2, %s229
        %p231 = pneg %p106
        %p232 = pneg %p103
        %p233 = pneg %p134
        %p234 = pneg %p131
        %s235 = sand.u32 %s121, 1
        %s236 = scalar_lea.sflag [#allocation4], %s235
        %s237 = sand.u32 %s121, 1
        %s238 = smul.addr %s237, 512
        %s239 = scalar_lea.vmem [#allocation7], %s238
        %s240 = smul.u32 32, %s25
        %s241 = smul.u32 2, %s26
        %s242 = smul.u32 2, %s26
        %p243 = scmp.lt.s32.totalorder %s242, 1
        %s244 = scalar_select %p243, %s242, 1
        %s245 = scalar_lea.vmem %s2, %s244
        %s246 = smul.u32 2, %s26
        %s247 = smul.u32 32, %s25
        %s248 = smul.u32 2, %s26
        %v250 = vld [vmem:[%s209] sm:$0xf]
        %v251 = vld [vmem:[%s209 + $0x4] sm:$0xf]
        %v252 = vld [vmem:[%s209 + $0x8] sm:$0xf]
        %v253 = vld [vmem:[%s209 + $0xc] sm:$0xf]
        %v254 = vld [vmem:[%s209 + $0x10] sm:$0xf]
        %v255 = vld [vmem:[%s209 + $0x14] sm:$0xf]
        %v256 = vld [vmem:[%s209 + $0x18] sm:$0xf]
        %v257 = vld [vmem:[%s209 + $0x1c] sm:$0xf]
        %v258 = vld [vmem:[%s209 + $0x20] sm:$0xf]
        %v259 = vld [vmem:[%s209 + $0x24] sm:$0xf]
        %v260 = vld [vmem:[%s209 + $0x28] sm:$0xf]
        %v261 = vld [vmem:[%s209 + $0x2c] sm:$0xf]
        %v262 = vld [vmem:[%s209 + $0x30] sm:$0xf]
        %v263 = vld [vmem:[%s209 + $0x34] sm:$0xf]
        %v264 = vld [vmem:[%s209 + $0x38] sm:$0xf]
        %v265 = vld [vmem:[%s209 + $0x3c] sm:$0xf]
        %v266 = vld [vmem:[%s209 + $0x40] sm:$0xf]
        %v267 = vld [vmem:[%s209 + $0x44] sm:$0xf]
        %v268 = vld [vmem:[%s209 + $0x48] sm:$0xf]
        %v269 = vld [vmem:[%s209 + $0x4c] sm:$0xf]
        %v270 = vld [vmem:[%s209 + $0x50] sm:$0xf]
        %v271 = vld [vmem:[%s209 + $0x54] sm:$0xf]
        %v272 = vld [vmem:[%s209 + $0x58] sm:$0xf]
        %v273 = vld [vmem:[%s209 + $0x5c] sm:$0xf]
        %v274 = vld [vmem:[%s209 + $0x60] sm:$0xf]
        %v275 = vld [vmem:[%s209 + $0x64] sm:$0xf]
        %v276 = vld [vmem:[%s209 + $0x68] sm:$0xf]
        %v277 = vld [vmem:[%s209 + $0x6c] sm:$0xf]
        %v278 = vld [vmem:[%s209 + $0x70] sm:$0xf]
        %v279 = vld [vmem:[%s209 + $0x74] sm:$0xf]
        %v280 = vld [vmem:[%s209 + $0x78] sm:$0xf]
        %v281 = vld [vmem:[%s209 + $0x7c] sm:$0xf]
        %v282 = vld [vmem:[#allocation5] sm:$0xff]
        %v283 = vld [vmem:[#allocation5 + $0x8] sm:$0xff]
        %v284 = vld [vmem:[#allocation5 + $0x10] sm:$0xff]
        %v285 = vld [vmem:[#allocation5 + $0x18] sm:$0xff]
        %v286 = vld [vmem:[#allocation5 + $0x20] sm:$0xff]
        %v287 = vld [vmem:[#allocation5 + $0x28] sm:$0xff]
        %v288 = vld [vmem:[#allocation5 + $0x30] sm:$0xff]
        %v289 = vld [vmem:[#allocation5 + $0x38] sm:$0xff]
        %v290 = vld [vmem:[#allocation5 + $0x40] sm:$0xff]
        %v291 = vld [vmem:[#allocation5 + $0x48] sm:$0xff]
        %v292 = vld [vmem:[#allocation5 + $0x50] sm:$0xff]
        %v293 = vld [vmem:[#allocation5 + $0x58] sm:$0xff]
        %v294 = vld [vmem:[#allocation5 + $0x60] sm:$0xff]
        %v295 = vld [vmem:[#allocation5 + $0x68] sm:$0xff]
        %v296 = vld [vmem:[#allocation5 + $0x70] sm:$0xff]
        %v297 = vld [vmem:[#allocation5 + $0x78] sm:$0xff]
        %v298 = vld [vmem:[%s245] sm:$0x3]
        %v300 = vlaneseq
        %v301 = vshrl.u32 %v300, 7
        %v302 = vsub.s32 0, %v301
        %v303 = vrot.slane %v298, %v302
        %v304 = vlaneseq
        %v305 = vshrl.u32 %v304, 7
        %v306 = vsub.s32 1, %v305
        %v307 = vrot.slane %v298, %v306
        %v342 = vunpack.c.l.b16 %v250
        %v343 = vunpack.c.l.b16 %v251
        %v344 = vunpack.c.l.b16 %v252
        %v345 = vunpack.c.l.b16 %v253
        %v346 = vunpack.c.l.b16 %v254
        %v347 = vunpack.c.l.b16 %v255
        %v348 = vunpack.c.l.b16 %v256
        %v349 = vunpack.c.l.b16 %v257
        %v350 = vunpack.c.l.b16 %v258
        %v351 = vunpack.c.l.b16 %v259
        %v352 = vunpack.c.l.b16 %v260
        %v353 = vunpack.c.l.b16 %v261
        %v354 = vunpack.c.l.b16 %v262
        %v355 = vunpack.c.l.b16 %v263
        %v356 = vunpack.c.l.b16 %v264
        %v357 = vunpack.c.l.b16 %v265
        %v358 = vunpack.c.l.b16 %v266
        %v359 = vunpack.c.l.b16 %v267
        %v360 = vunpack.c.l.b16 %v268
        %v361 = vunpack.c.l.b16 %v269
        %v362 = vunpack.c.l.b16 %v270
        %v363 = vunpack.c.l.b16 %v271
        %v364 = vunpack.c.l.b16 %v272
        %v365 = vunpack.c.l.b16 %v273
        %v366 = vunpack.c.l.b16 %v274
        %v367 = vunpack.c.l.b16 %v275
        %v368 = vunpack.c.l.b16 %v276
        %v369 = vunpack.c.l.b16 %v277
        %v370 = vunpack.c.l.b16 %v278
        %v371 = vunpack.c.l.b16 %v279
        %v372 = vunpack.c.l.b16 %v280
        %v373 = vunpack.c.l.b16 %v281
        %v374 = vpack.c.b16 %v343, %v342
        %v375 = vpack.c.b16 %v345, %v344
        %v376 = vpack.c.b16 %v347, %v346
        %v377 = vpack.c.b16 %v349, %v348
        %v378 = vpack.c.b16 %v351, %v350
        %v379 = vpack.c.b16 %v353, %v352
        %v380 = vpack.c.b16 %v355, %v354
        %v381 = vpack.c.b16 %v357, %v356
        %v382 = vpack.c.b16 %v359, %v358
        %v383 = vpack.c.b16 %v361, %v360
        %v384 = vpack.c.b16 %v363, %v362
        %v385 = vpack.c.b16 %v365, %v364
        %v386 = vpack.c.b16 %v367, %v366
        %v387 = vpack.c.b16 %v369, %v368
        %v388 = vpack.c.b16 %v371, %v370
        %v389 = vpack.c.b16 %v373, %v372
        %v422 = vunpack.c.l.b16 %v282
        %v423 = vunpack.c.h.b16 %v282
        %v424 = vunpack.c.l.b16 %v283
        %v425 = vunpack.c.h.b16 %v283
        %v426 = vunpack.c.l.b16 %v284
        %v427 = vunpack.c.h.b16 %v284
        %v428 = vunpack.c.l.b16 %v285
        %v429 = vunpack.c.h.b16 %v285
        %v430 = vunpack.c.l.b16 %v286
        %v431 = vunpack.c.h.b16 %v286
        %v432 = vunpack.c.l.b16 %v287
        %v433 = vunpack.c.h.b16 %v287
        %v434 = vunpack.c.l.b16 %v288
        %v435 = vunpack.c.h.b16 %v288
        %v436 = vunpack.c.l.b16 %v289
        %v437 = vunpack.c.h.b16 %v289
        %v438 = vunpack.c.l.b16 %v290
        %v439 = vunpack.c.h.b16 %v290
        %v440 = vunpack.c.l.b16 %v291
        %v441 = vunpack.c.h.b16 %v291
        %v442 = vunpack.c.l.b16 %v292
        %v443 = vunpack.c.h.b16 %v292
        %v444 = vunpack.c.l.b16 %v293
        %v445 = vunpack.c.h.b16 %v293
        %v446 = vunpack.c.l.b16 %v294
        %v447 = vunpack.c.h.b16 %v294
        %v448 = vunpack.c.l.b16 %v295
        %v449 = vunpack.c.h.b16 %v295
        %v450 = vunpack.c.l.b16 %v296
        %v451 = vunpack.c.h.b16 %v296
        %v452 = vunpack.c.l.b16 %v297
        %v453 = vunpack.c.h.b16 %v297
        %v454 = vpack.c.b16 %v424, %v422
        %v455 = vpack.c.b16 %v425, %v423
        %v456 = vpack.c.b16 %v428, %v426
        %v457 = vpack.c.b16 %v429, %v427
        %v458 = vpack.c.b16 %v432, %v430
        %v459 = vpack.c.b16 %v433, %v431
        %v460 = vpack.c.b16 %v436, %v434
        %v461 = vpack.c.b16 %v437, %v435
        %v462 = vpack.c.b16 %v440, %v438
        %v463 = vpack.c.b16 %v441, %v439
        %v464 = vpack.c.b16 %v444, %v442
        %v465 = vpack.c.b16 %v445, %v443
        %v466 = vpack.c.b16 %v448, %v446
        %v467 = vpack.c.b16 %v449, %v447
        %v468 = vpack.c.b16 %v452, %v450
        %v469 = vpack.c.b16 %v453, %v451
        %486 = vmatprep.subr.bf16.mxu0 %v469
        %487 = vmatpush1.bf16.msra.mxu0 %v468
        %488 = vmatprep.subr.bf16.mxu0 %v467
        %489 = vmatpush1.bf16.msra.mxu0 %v466
        %490 = vmatprep.subr.bf16.mxu0 %v465
        %491 = vmatpush1.bf16.msra.mxu0 %v464
        %492 = vmatprep.subr.bf16.mxu0 %v463
        %493 = vmatpush1.bf16.msra.mxu0 %v462
        %494 = vmatprep.subr.bf16.mxu0 %v461
        %495 = vmatpush1.bf16.msra.mxu0 %v460
        %496 = vmatprep.subr.bf16.mxu0 %v459
        %497 = vmatpush1.bf16.msra.mxu0 %v458
        %498 = vmatprep.subr.bf16.mxu0 %v457
        %499 = vmatpush1.bf16.msra.mxu0 %v456
        %500 = vmatprep.subr.bf16.mxu0 %v455
        %501 = vmatpush1.bf16.msra.mxu0 %v454
        %502 = vmatprep.subr.bf16.mxu0 0
        %503 = vmatpush2.bf16.msra.mxu0 0
        %504 = vmatprep.subr.bf16.mxu0 0
        %505 = vmatpush2.bf16.msra.mxu0 0
        %506 = vmatprep.subr.bf16.mxu0 0
        %507 = vmatpush2.bf16.msra.mxu0 0
        %508 = vmatprep.subr.bf16.mxu0 0
        %509 = vmatpush2.bf16.msra.mxu0 0
        %510 = vmatprep.subr.bf16.mxu0 0
        %511 = vmatpush2.bf16.msra.mxu0 0
        %512 = vmatprep.subr.bf16.mxu0 0
        %513 = vmatpush2.bf16.msra.mxu0 0
        %514 = vmatprep.subr.bf16.mxu0 0
        %515 = vmatpush2.bf16.msra.mxu0 0
        %516 = vmatprep.subr.bf16.mxu0 0
        %517 = vmatpush2.bf16.msra.mxu0 0
        %518 = vmatprep.mubr.bf16.mxu0 0
        %519 = vmatmul.mubr.bf16.gmra.mxu0 %v374
        %v520 = vpop.f32.mrf.mxu0
        %v521 = vadd.f32 %v303, %v520
        %v522 = vpop.f32.mrf.mxu0
        %v523 = vadd.f32 %v307, %v522
        %v524 = vpop.f32.mrf.mxu0
        %v525 = vadd.f32 %v303, %v524
        %v526 = vpop.f32.mrf.mxu0
        %v527 = vadd.f32 %v307, %v526
        %528 = vmatprep.mubr.bf16.mxu0 0
        %529 = vmatmul.mubr.bf16.gmra.mxu0 %v375
        %v530 = vpop.f32.mrf.mxu0
        %v531 = vadd.f32 %v303, %v530
        %v532 = vpop.f32.mrf.mxu0
        %v533 = vadd.f32 %v307, %v532
        %v534 = vpop.f32.mrf.mxu0
        %v535 = vadd.f32 %v303, %v534
        %v536 = vpop.f32.mrf.mxu0
        %v537 = vadd.f32 %v307, %v536
        %538 = vmatprep.mubr.bf16.mxu0 0
        %539 = vmatmul.mubr.bf16.gmra.mxu0 %v376
        %v540 = vpop.f32.mrf.mxu0
        %v541 = vadd.f32 %v303, %v540
        %v542 = vpop.f32.mrf.mxu0
        %v543 = vadd.f32 %v307, %v542
        %v544 = vpop.f32.mrf.mxu0
        %v545 = vadd.f32 %v303, %v544
        %v546 = vpop.f32.mrf.mxu0
        %v547 = vadd.f32 %v307, %v546
        %548 = vmatprep.mubr.bf16.mxu0 0
        %549 = vmatmul.mubr.bf16.gmra.mxu0 %v377
        %v550 = vpop.f32.mrf.mxu0
        %v551 = vadd.f32 %v303, %v550
        %v552 = vpop.f32.mrf.mxu0
        %v553 = vadd.f32 %v307, %v552
        %v554 = vpop.f32.mrf.mxu0
        %v555 = vadd.f32 %v303, %v554
        %v556 = vpop.f32.mrf.mxu0
        %v557 = vadd.f32 %v307, %v556
        %558 = vmatprep.mubr.bf16.mxu0 0
        %559 = vmatmul.mubr.bf16.gmra.mxu0 %v378
        %v560 = vpop.f32.mrf.mxu0
        %v561 = vadd.f32 %v303, %v560
        %v562 = vpop.f32.mrf.mxu0
        %v563 = vadd.f32 %v307, %v562
        %v564 = vpop.f32.mrf.mxu0
        %v565 = vadd.f32 %v303, %v564
        %v566 = vpop.f32.mrf.mxu0
        %v567 = vadd.f32 %v307, %v566
        %568 = vmatprep.mubr.bf16.mxu0 0
        %569 = vmatmul.mubr.bf16.gmra.mxu0 %v379
        %v570 = vpop.f32.mrf.mxu0
        %v571 = vadd.f32 %v303, %v570
        %v572 = vpop.f32.mrf.mxu0
        %v573 = vadd.f32 %v307, %v572
        %v574 = vpop.f32.mrf.mxu0
        %v575 = vadd.f32 %v303, %v574
        %v576 = vpop.f32.mrf.mxu0
        %v577 = vadd.f32 %v307, %v576
        %578 = vmatprep.mubr.bf16.mxu0 0
        %579 = vmatmul.mubr.bf16.gmra.mxu0 %v380
        %v580 = vpop.f32.mrf.mxu0
        %v581 = vadd.f32 %v303, %v580
        %v582 = vpop.f32.mrf.mxu0
        %v583 = vadd.f32 %v307, %v582
        %v584 = vpop.f32.mrf.mxu0
        %v585 = vadd.f32 %v303, %v584
        %v586 = vpop.f32.mrf.mxu0
        %v587 = vadd.f32 %v307, %v586
        %588 = vmatprep.mubr.bf16.mxu0 0
        %589 = vmatmul.mubr.bf16.gmra.mxu0 %v381
        %v590 = vpop.f32.mrf.mxu0
        %v591 = vadd.f32 %v303, %v590
        %v592 = vpop.f32.mrf.mxu0
        %v593 = vadd.f32 %v307, %v592
        %v594 = vpop.f32.mrf.mxu0
        %v595 = vadd.f32 %v303, %v594
        %v596 = vpop.f32.mrf.mxu0
        %v597 = vadd.f32 %v307, %v596
        %598 = vmatprep.mubr.bf16.mxu0 0
        %599 = vmatmul.mubr.bf16.gmra.mxu0 %v382
        %v600 = vpop.f32.mrf.mxu0
        %v601 = vadd.f32 %v303, %v600
        %v602 = vpop.f32.mrf.mxu0
        %v603 = vadd.f32 %v307, %v602
        %v604 = vpop.f32.mrf.mxu0
        %v605 = vadd.f32 %v303, %v604
        %v606 = vpop.f32.mrf.mxu0
        %v607 = vadd.f32 %v307, %v606
        %608 = vmatprep.mubr.bf16.mxu0 0
        %609 = vmatmul.mubr.bf16.gmra.mxu0 %v383
        %v610 = vpop.f32.mrf.mxu0
        %v611 = vadd.f32 %v303, %v610
        %v612 = vpop.f32.mrf.mxu0
        %v613 = vadd.f32 %v307, %v612
        %v614 = vpop.f32.mrf.mxu0
        %v615 = vadd.f32 %v303, %v614
        %v616 = vpop.f32.mrf.mxu0
        %v617 = vadd.f32 %v307, %v616
        %618 = vmatprep.mubr.bf16.mxu0 0
        %619 = vmatmul.mubr.bf16.gmra.mxu0 %v384
        %v620 = vpop.f32.mrf.mxu0
        %v621 = vadd.f32 %v303, %v620
        %v622 = vpop.f32.mrf.mxu0
        %v623 = vadd.f32 %v307, %v622
        %v624 = vpop.f32.mrf.mxu0
        %v625 = vadd.f32 %v303, %v624
        %v626 = vpop.f32.mrf.mxu0
        %v627 = vadd.f32 %v307, %v626
        %628 = vmatprep.mubr.bf16.mxu0 0
        %629 = vmatmul.mubr.bf16.gmra.mxu0 %v385
        %v630 = vpop.f32.mrf.mxu0
        %v631 = vadd.f32 %v303, %v630
        %v632 = vpop.f32.mrf.mxu0
        %v633 = vadd.f32 %v307, %v632
        %v634 = vpop.f32.mrf.mxu0
        %v635 = vadd.f32 %v303, %v634
        %v636 = vpop.f32.mrf.mxu0
        %v637 = vadd.f32 %v307, %v636
        %638 = vmatprep.mubr.bf16.mxu0 0
        %639 = vmatmul.mubr.bf16.gmra.mxu0 %v386
        %v640 = vpop.f32.mrf.mxu0
        %v641 = vadd.f32 %v303, %v640
        %v642 = vpop.f32.mrf.mxu0
        %v643 = vadd.f32 %v307, %v642
        %v644 = vpop.f32.mrf.mxu0
        %v645 = vadd.f32 %v303, %v644
        %v646 = vpop.f32.mrf.mxu0
        %v647 = vadd.f32 %v307, %v646
        %648 = vmatprep.mubr.bf16.mxu0 0
        %649 = vmatmul.mubr.bf16.gmra.mxu0 %v387
        %v650 = vpop.f32.mrf.mxu0
        %v651 = vadd.f32 %v303, %v650
        %v652 = vpop.f32.mrf.mxu0
        %v653 = vadd.f32 %v307, %v652
        %v654 = vpop.f32.mrf.mxu0
        %v655 = vadd.f32 %v303, %v654
        %v656 = vpop.f32.mrf.mxu0
        %v657 = vadd.f32 %v307, %v656
        %658 = vmatprep.mubr.bf16.mxu0 0
        %659 = vmatmul.mubr.bf16.gmra.mxu0 %v388
        %v660 = vpop.f32.mrf.mxu0
        %v661 = vadd.f32 %v303, %v660
        %v662 = vpop.f32.mrf.mxu0
        %v663 = vadd.f32 %v307, %v662
        %v664 = vpop.f32.mrf.mxu0
        %v665 = vadd.f32 %v303, %v664
        %v666 = vpop.f32.mrf.mxu0
        %v667 = vadd.f32 %v307, %v666
        %668 = vmatprep.mubr.bf16.mxu0 0
        %669 = vmatmul.mubr.bf16.gmra.mxu0 %v389
        %v670 = vpop.f32.mrf.mxu0
        %v671 = vadd.f32 %v303, %v670
        %v672 = vpop.f32.mrf.mxu0
        %v673 = vadd.f32 %v307, %v672
        %v674 = vpop.f32.mrf.mxu0
        %v675 = vadd.f32 %v303, %v674
        %v676 = vpop.f32.mrf.mxu0
        %v677 = vadd.f32 %v307, %v676
        %678 = vdwg.mxu0
        %v679 = vmax.f32 %v521, 0.0
        %v680 = vmax.f32 %v523, 0.0
        %v681 = vmax.f32 %v525, 0.0
        %v682 = vmax.f32 %v527, 0.0
        %v683 = vmax.f32 %v531, 0.0
        %v684 = vmax.f32 %v533, 0.0
        %v685 = vmax.f32 %v535, 0.0
        %v686 = vmax.f32 %v537, 0.0
        %v687 = vmax.f32 %v541, 0.0
        %v688 = vmax.f32 %v543, 0.0
        %v689 = vmax.f32 %v545, 0.0
        %v690 = vmax.f32 %v547, 0.0
        %v691 = vmax.f32 %v551, 0.0
        %v692 = vmax.f32 %v553, 0.0
        %v693 = vmax.f32 %v555, 0.0
        %v694 = vmax.f32 %v557, 0.0
        %v695 = vmax.f32 %v561, 0.0
        %v696 = vmax.f32 %v563, 0.0
        %v697 = vmax.f32 %v565, 0.0
        %v698 = vmax.f32 %v567, 0.0
        %v699 = vmax.f32 %v571, 0.0
        %v700 = vmax.f32 %v573, 0.0
        %v701 = vmax.f32 %v575, 0.0
        %v702 = vmax.f32 %v577, 0.0
        %v703 = vmax.f32 %v581, 0.0
        %v704 = vmax.f32 %v583, 0.0
        %v705 = vmax.f32 %v585, 0.0
        %v706 = vmax.f32 %v587, 0.0
        %v707 = vmax.f32 %v591, 0.0
        %v708 = vmax.f32 %v593, 0.0
        %v709 = vmax.f32 %v595, 0.0
        %v710 = vmax.f32 %v597, 0.0
        %v711 = vmax.f32 %v601, 0.0
        %v712 = vmax.f32 %v603, 0.0
        %v713 = vmax.f32 %v605, 0.0
        %v714 = vmax.f32 %v607, 0.0
        %v715 = vmax.f32 %v611, 0.0
        %v716 = vmax.f32 %v613, 0.0
        %v717 = vmax.f32 %v615, 0.0
        %v718 = vmax.f32 %v617, 0.0
        %v719 = vmax.f32 %v621, 0.0
        %v720 = vmax.f32 %v623, 0.0
        %v721 = vmax.f32 %v625, 0.0
        %v722 = vmax.f32 %v627, 0.0
        %v723 = vmax.f32 %v631, 0.0
        %v724 = vmax.f32 %v633, 0.0
        %v725 = vmax.f32 %v635, 0.0
        %v726 = vmax.f32 %v637, 0.0
        %v727 = vmax.f32 %v641, 0.0
        %v728 = vmax.f32 %v643, 0.0
        %v729 = vmax.f32 %v645, 0.0
        %v730 = vmax.f32 %v647, 0.0
        %v731 = vmax.f32 %v651, 0.0
        %v732 = vmax.f32 %v653, 0.0
        %v733 = vmax.f32 %v655, 0.0
        %v734 = vmax.f32 %v657, 0.0
        %v735 = vmax.f32 %v661, 0.0
        %v736 = vmax.f32 %v663, 0.0
        %v737 = vmax.f32 %v665, 0.0
        %v738 = vmax.f32 %v667, 0.0
        %v739 = vmax.f32 %v671, 0.0
        %v740 = vmax.f32 %v673, 0.0
        %v741 = vmax.f32 %v675, 0.0
        %v742 = vmax.f32 %v677, 0.0
        %743 = vst [vmem:[%s239] sm:$0xff] %v679
        %744 = vst [vmem:[%s239 + $0x8] sm:$0xff] %v680
        %745 = vst [vmem:[%s239 + $0x10] sm:$0xff] %v681
        %746 = vst [vmem:[%s239 + $0x18] sm:$0xff] %v682
        %747 = vst [vmem:[%s239 + $0x20] sm:$0xff] %v683
        %748 = vst [vmem:[%s239 + $0x28] sm:$0xff] %v684
        %749 = vst [vmem:[%s239 + $0x30] sm:$0xff] %v685
        %750 = vst [vmem:[%s239 + $0x38] sm:$0xff] %v686
        %751 = vst [vmem:[%s239 + $0x40] sm:$0xff] %v687
        %752 = vst [vmem:[%s239 + $0x48] sm:$0xff] %v688
        %753 = vst [vmem:[%s239 + $0x50] sm:$0xff] %v689
        %754 = vst [vmem:[%s239 + $0x58] sm:$0xff] %v690
        %755 = vst [vmem:[%s239 + $0x60] sm:$0xff] %v691
        %756 = vst [vmem:[%s239 + $0x68] sm:$0xff] %v692
        %757 = vst [vmem:[%s239 + $0x70] sm:$0xff] %v693
        %758 = vst [vmem:[%s239 + $0x78] sm:$0xff] %v694
        %759 = vst [vmem:[%s239 + $0x80] sm:$0xff] %v695
        %760 = vst [vmem:[%s239 + $0x88] sm:$0xff] %v696
        %761 = vst [vmem:[%s239 + $0x90] sm:$0xff] %v697
        %762 = vst [vmem:[%s239 + $0x98] sm:$0xff] %v698
        %763 = vst [vmem:[%s239 + $0xa0] sm:$0xff] %v699
        %764 = vst [vmem:[%s239 + $0xa8] sm:$0xff] %v700
        %765 = vst [vmem:[%s239 + $0xb0] sm:$0xff] %v701
        %766 = vst [vmem:[%s239 + $0xb8] sm:$0xff] %v702
        %767 = vst [vmem:[%s239 + $0xc0] sm:$0xff] %v703
        %768 = vst [vmem:[%s239 + $0xc8] sm:$0xff] %v704
        %769 = vst [vmem:[%s239 + $0xd0] sm:$0xff] %v705
        %770 = vst [vmem:[%s239 + $0xd8] sm:$0xff] %v706
        %771 = vst [vmem:[%s239 + $0xe0] sm:$0xff] %v707
        %772 = vst [vmem:[%s239 + $0xe8] sm:$0xff] %v708
        %773 = vst [vmem:[%s239 + $0xf0] sm:$0xff] %v709
        %774 = vst [vmem:[%s239 + $0xf8] sm:$0xff] %v710
        %775 = vst [vmem:[%s239 + $0x100] sm:$0xff] %v711
        %776 = vst [vmem:[%s239 + $0x108] sm:$0xff] %v712
        %777 = vst [vmem:[%s239 + $0x110] sm:$0xff] %v713
        %778 = vst [vmem:[%s239 + $0x118] sm:$0xff] %v714
        %779 = vst [vmem:[%s239 + $0x120] sm:$0xff] %v715
        %780 = vst [vmem:[%s239 + $0x128] sm:$0xff] %v716
        %781 = vst [vmem:[%s239 + $0x130] sm:$0xff] %v717
        %782 = vst [vmem:[%s239 + $0x138] sm:$0xff] %v718
        %783 = vst [vmem:[%s239 + $0x140] sm:$0xff] %v719
        %784 = vst [vmem:[%s239 + $0x148] sm:$0xff] %v720
        %785 = vst [vmem:[%s239 + $0x150] sm:$0xff] %v721
        %786 = vst [vmem:[%s239 + $0x158] sm:$0xff] %v722
        %787 = vst [vmem:[%s239 + $0x160] sm:$0xff] %v723
        %788 = vst [vmem:[%s239 + $0x168] sm:$0xff] %v724
        %789 = vst [vmem:[%s239 + $0x170] sm:$0xff] %v725
        %790 = vst [vmem:[%s239 + $0x178] sm:$0xff] %v726
        %791 = vst [vmem:[%s239 + $0x180] sm:$0xff] %v727
        %792 = vst [vmem:[%s239 + $0x188] sm:$0xff] %v728
        %793 = vst [vmem:[%s239 + $0x190] sm:$0xff] %v729
        %794 = vst [vmem:[%s239 + $0x198] sm:$0xff] %v730
        %795 = vst [vmem:[%s239 + $0x1a0] sm:$0xff] %v731
        %796 = vst [vmem:[%s239 + $0x1a8] sm:$0xff] %v732
        %797 = vst [vmem:[%s239 + $0x1b0] sm:$0xff] %v733
        %798 = vst [vmem:[%s239 + $0x1b8] sm:$0xff] %v734
        %799 = vst [vmem:[%s239 + $0x1c0] sm:$0xff] %v735
        %800 = vst [vmem:[%s239 + $0x1c8] sm:$0xff] %v736
        %801 = vst [vmem:[%s239 + $0x1d0] sm:$0xff] %v737
        %802 = vst [vmem:[%s239 + $0x1d8] sm:$0xff] %v738
        %803 = vst [vmem:[%s239 + $0x1e0] sm:$0xff] %v739
        %804 = vst [vmem:[%s239 + $0x1e8] sm:$0xff] %v740
        %805 = vst [vmem:[%s239 + $0x1f0] sm:$0xff] %v741
        %806 = vst [vmem:[%s239 + $0x1f8] sm:$0xff] %v742
        %s807 = sand.u32 %s121, 1
        %s808 = scalar_lea.sflag [#allocation4], %s807
        %s809 = sand.u32 %s121, 1
        %s810 = smul.addr %s809, 512
        %s811 = scalar_lea.vmem [#allocation7], %s810
        // Predicated region
        $region41: #{tpu_custom_call.1} parent=31 // pred_check
          %p812 = pneg %p131
        $region42: #{tpu_custom_call.1} parent=31 // pred_check_branch
          %814 = sbr.rel (%p812) target = $region44
        $region43: #{tpu_custom_call.1} parent=31 // pred_region
          %s815 = smul.u32 32, %s25
          %s816 = smul.u32 2, %s26
          %s818 = ssub.s32 8192, 8192
          %819 = vsyncadd %s808, %s818
          %s820 = smul.addr %s815, 2
          %s821 = sadd.s32 %s816, %s820
          %s822 = smul.addr %s821, 128
          %s823 = scalar_lea.hbm %s3, %s822
          %s824 = sshll.u32 %s811, 4
          %s825 = int_to_ptr.vmem [resolvable:$true] %s824
          %830 = dma.vmem_to_hbm [thread:$0]  %s825, 8192, %s823, %s808, 256, 256, 16
        $region44: #{tpu_custom_call.1} parent=31 // pred_fallthru
          _
      $region32: #{tpu_custom_call.1} parent=5 // pred_fallthru
        _
      %p831 = scmp.le.s32.totalorder 2, %s16
      // Predicated region
      $region45: #{tpu_custom_call.1} parent=5 // pred_check
        %p832 = pneg %p831
      $region46: #{tpu_custom_call.1} parent=5 // pred_check_branch
        %834 = sbr.rel (%p832) target = $region48
      $region47: #{tpu_custom_call.1} parent=5 // pred_region
        %s835 = ssub.s32 %s16, 2
        // Predicated region
        $region49: #{tpu_custom_call.1} parent=47 // pred_check
          %p836 = pneg %p137
        $region50: #{tpu_custom_call.1} parent=47 // pred_check_branch
          %838 = sbr.rel (%p836) target = $region52
        $region51: #{tpu_custom_call.1} parent=47 // pred_region
          %s839 = sand.u32 %s122, 1
          %s840 = scalar_lea.sflag [#allocation4], %s839
          %s841 = sand.u32 %s122, 1
          %s842 = smul.addr %s841, 512
          %s843 = scalar_lea.vmem [#allocation7], %s842
          %844 = dma.done %s840, 8192
        $region52: #{tpu_custom_call.1} parent=47 // pred_fallthru
          _
      $region48: #{tpu_custom_call.1} parent=5 // pred_fallthru
        _
    $region6: #{tpu_custom_call.1} parent=1 // loop_footer
      %s20 = sadd.s32 1, %s16
    $region7: #{tpu_custom_call.1} parent=1 // loop_footer_branch
      %15 = sbr.rel target = $region3
    $region8: #{tpu_custom_call.1} parent=1 // loop_exit
      _
    %845 = vsyncpa [#allocation3], 1
    %s846 = scalar_lea.sflag [#allocation3], 1
    %847 = vsyncpa %s846, 1
    %848 = vsyncpa [#allocation6], 1
    %849 = vsyncpa [#allocation4], 1
    %s850 = scalar_lea.sflag [#allocation4], 1
    %851 = vsyncpa %s850, 1

</llo_original>
